<compile_context>
chip_gen: v7x
topology: tpu7x:2x2x1
jax: 0.10.0
libtpu: 0.0.40
codegen_flags: <defaults>
</compile_context>

<pallas_src>
import functools

import jax
import jax.numpy as jnp
from jax import lax
from jax.experimental import pallas as pl
from jax.experimental.pallas import tpu as pltpu

_VMEM_LIMIT = 48 * 1024 * 1024  # above scoped defaults, below v7x physical 64 MiB


def _pick_tile(dim, target, align):
    """Largest `align`-multiple <= target that evenly divides `dim`, else the full dim.

    Returned tile always satisfies the TPU (8, 128) block constraint: it is either a
    multiple of `align` or equal to the full array dimension.
    """
    if dim <= target:
        return dim
    t = (target // align) * align
    while t >= align:
        if dim % t == 0:
            return t
        t -= align
    return dim


# ------------------------------------------------------------------ #
# Tiled linear (matmul + bias) kernel
# ------------------------------------------------------------------ #
def _linear_kernel(x_ref, w_ref, b_ref, o_ref, acc_ref):
    k = pl.program_id(2)

    @pl.when(k == 0)
    def _():
        acc_ref[...] = jnp.zeros_like(acc_ref)

    acc_ref[...] += jnp.dot(x_ref[...], w_ref[...], preferred_element_type=jnp.float32)

    @pl.when(k == pl.num_programs(2) - 1)
    def _():
        o_ref[...] = (acc_ref[...] + b_ref[...].astype(jnp.float32)).astype(o_ref.dtype)


def pallas_linear(x2d, w, b, *, out_dtype=None, compute_dtype=None,
                  tm_target=256, tn_target=256, tk_target=512):
    """x2d: (M, K), w: (K, N), b: (N,)  ->  (M, N); f32 accumulation on the MXU."""
    M, K = x2d.shape
    K2, N = w.shape
    assert K == K2
    out_dtype = out_dtype if out_dtype is not None else x2d.dtype

    if compute_dtype is not None:
        x2d = x2d.astype(compute_dtype)
        w = w.astype(compute_dtype)

    tm = _pick_tile(M, tm_target, 8)
    tn = _pick_tile(N, tn_target, 128)
    tk = _pick_tile(K, tk_target, 128)
    grid = (M // tm, N // tn, K // tk)

    return pl.pallas_call(
        _linear_kernel,
        out_shape=jax.ShapeDtypeStruct((M, N), out_dtype),
        grid=grid,
        in_specs=[
            pl.BlockSpec((tm, tk), lambda i, j, k: (i, k)),
            pl.BlockSpec((tk, tn), lambda i, j, k: (k, j)),
            pl.BlockSpec((1, tn), lambda i, j, k: (0, j)),
        ],
        out_specs=pl.BlockSpec((tm, tn), lambda i, j, k: (i, j)),
        scratch_shapes=[pltpu.VMEM((tm, tn), jnp.float32)],
        compiler_params=pltpu.CompilerParams(
            dimension_semantics=("parallel", "parallel", "arbitrary"),
            vmem_limit_bytes=_VMEM_LIMIT,
        ),
    )(x2d, w, b.reshape(1, N).astype(jnp.float32))


# ------------------------------------------------------------------ #
# KV-blocked normalized causal linear attention kernel
# ------------------------------------------------------------------ #
def _norm_attn_kernel(q_ref, k_ref, v_ref, n_ref, o_ref, acc_ref, *, tq, tkv):
    # q: (tq, Dqk)  k: (tkv, Dqk)  v: (tkv, Dv)  n: (tq, 1)  o: (tq, Dv)
    qi = pl.program_id(2)
    ki = pl.program_id(3)
    nkv = pl.num_programs(3)

    q_start = qi * tq
    k_start = ki * tkv

    @pl.when(ki == 0)
    def _():
        acc_ref[...] = jnp.zeros_like(acc_ref)

    def compute(apply_mask):
        q = q_ref[...]
        k = k_ref[...]
        # scores = q @ k^T, contracting the head dim directly (no XLU transpose of k).
        s = lax.dot_general(q, k, dimension_numbers=(((1,), (1,)), ((), ())),
                            preferred_element_type=jnp.float32)          # (tq, tkv)
        if apply_mask:
            row = q_start + lax.broadcasted_iota(jnp.int32, (tq, tkv), 0)
            col = k_start + lax.broadcasted_iota(jnp.int32, (tq, tkv), 1)
            s = jnp.where(row >= col, s, 0.0)                            # causal mask
        acc_ref[...] += lax.dot_general(
            s.astype(v_ref.dtype), v_ref[...],
            dimension_numbers=(((1,), (0,)), ((), ())),
            preferred_element_type=jnp.float32)

    # Causal block structure:
    #   below      -> every (row, col) in this block satisfies row >= col (no mask)
    #   intersects -> the block contributes at all (otherwise skip both matmuls)
    below = (k_start + (tkv - 1)) <= q_start
    intersects = k_start <= (q_start + (tq - 1))

    @pl.when(below)
    def _():
        compute(False)

    @pl.when(jnp.logical_and(intersects, jnp.logical_not(below)))
    def _():
        compute(True)

    @pl.when(ki == nkv - 1)
    def _():
        # attn = (scores * mask) / exp(n)  ==>  o = (masked_scores @ v) * exp(-n),
        # applied once per (tq, Dv) tile instead of per (S, S) element.
        # NOTE: no softmax-style max subtraction exists in the reference module, so
        # exp(-n) can over/underflow for large |n|; expected range is moderate.
        scale = jnp.exp(-n_ref[...].astype(jnp.float32))                 # (tq, 1)
        o_ref[...] = (acc_ref[...] * scale).astype(o_ref.dtype)

    # TODO(synk): attention dropout is a no-op here (attention_dropout defaults to
    # 0.0 / eval mode); stateful PRNG dropout not emitted.


def pallas_self_norm_attention(q, k, v, n, *, out_dtype=jnp.float32,
                               tq_target=256, tkv_target=512):
    """q, k: (B, H, S, Dqk), v: (B, H, S, Dv), n: (B, H, S, 1) -> (B, H, S, Dv)."""
    B, H, S, Dqk = q.shape
    Dv = v.shape[-1]
    tq = _pick_tile(S, tq_target, 8)
    tkv = _pick_tile(S, tkv_target, 8)
    grid = (B, H, S // tq, S // tkv)

    kernel = functools.partial(_norm_attn_kernel, tq=tq, tkv=tkv)

    q_map = lambda b, h, qi, ki: (b, h, qi, 0)
    kv_map = lambda b, h, qi, ki: (b, h, ki, 0)

    return pl.pallas_call(
        kernel,
        out_shape=jax.ShapeDtypeStruct((B, H, S, Dv), out_dtype),
        grid=grid,
        in_specs=[
            pl.BlockSpec((None, None, tq, Dqk), q_map),
            pl.BlockSpec((None, None, tkv, Dqk), kv_map),
            pl.BlockSpec((None, None, tkv, Dv), kv_map),
            pl.BlockSpec((None, None, tq, 1), q_map),
        ],
        out_specs=pl.BlockSpec((None, None, tq, Dv), q_map),
        scratch_shapes=[pltpu.VMEM((tq, Dv), jnp.float32)],
        compiler_params=pltpu.CompilerParams(
            dimension_semantics=("parallel", "parallel", "parallel", "arbitrary"),
            vmem_limit_bytes=_VMEM_LIMIT,
        ),
    )(q, k, v, n)


# ------------------------------------------------------------------ #
# MHNA forward (glue in plain JAX, compute in Pallas)
# ------------------------------------------------------------------ #
def mhna_forward(x, params, num_heads, *, compute_dtype=None):
    B, S, d_model = x.shape
    d_qk = params["wqk_w"].shape[1] // 2
    head_dim = d_qk // num_heads
    v_dim = d_model // num_heads

    x2d = x.reshape(B * S, d_model)

    # Fused Wqk / Wv / Wn projection: one pass over x instead of three.
    w_fused = jnp.concatenate([params["wqk_w"], params["wv_w"], params["wn_w"]], axis=1)
    b_fused = jnp.concatenate([params["wqk_b"], params["wv_b"], params["wn_b"]], axis=0)
    proj = pallas_linear(x2d, w_fused, b_fused,
                         out_dtype=jnp.float32, compute_dtype=compute_dtype)

    qk = proj[:, : 2 * d_qk]
    v = proj[:, 2 * d_qk: 2 * d_qk + d_model]
    n = proj[:, 2 * d_qk + d_model:]

    # rearrange '... (two h d) -> ... two h d'
    qk = qk.reshape(B, S, 2, num_heads, head_dim)
    q = qk[:, :, 0]                                                  # (B, S, H, Dqk)
    k = qk[:, :, 1]
    v = v.reshape(B, S, num_heads, v_dim)                            # (B, S, H, Dv)
    n = n.reshape(B, S, num_heads)                                   # (B, S, H)

    # (B, H, S, D) layout for the attention kernel.
    # TODO(synk): these transposes could be folded into the BlockSpec index_map on the
    # (B, S, H, D) layout, but a size-1 head block on the sublane axis is not portable
    # for small head counts, so the explicit layout change stays here.
    q_bhsd = jnp.transpose(q, (0, 2, 1, 3))
    k_bhsd = jnp.transpose(k, (0, 2, 1, 3))
    v_bhsd = jnp.transpose(v, (0, 2, 1, 3))
    n_bhs1 = jnp.transpose(n, (0, 2, 1))[..., None]                  # (B, H, S, 1), f32

    if compute_dtype is not None:
        q_bhsd = q_bhsd.astype(compute_dtype)
        k_bhsd = k_bhsd.astype(compute_dtype)
        v_bhsd = v_bhsd.astype(compute_dtype)

    ctx_dtype = compute_dtype if compute_dtype is not None else jnp.float32
    ctx = pallas_self_norm_attention(q_bhsd, k_bhsd, v_bhsd, n_bhs1,
                                     out_dtype=ctx_dtype)             # (B, H, S, Dv)
    ctx = jnp.transpose(ctx, (0, 2, 1, 3)).reshape(B * S, d_model)

    out = pallas_linear(ctx, params["out_w"], params["out_b"],
                        out_dtype=x.dtype, compute_dtype=compute_dtype)
    return out.reshape(B, S, d_model)


# ------------------------------------------------------------------ #
# Pure-JAX reference (mirrors the PyTorch semantics) for verification
# ------------------------------------------------------------------ #
def mhna_reference(x, params, num_heads):
    B, S, d_model = x.shape
    d_qk = params["wqk_w"].shape[1] // 2
    head_dim = d_qk // num_heads
    v_dim = d_model // num_heads

    qk = x @ params["wqk_w"] + params["wqk_b"]
    v = x @ params["wv_w"] + params["wv_b"]
    n = x @ params["wn_w"] + params["wn_b"]

    qk = qk.reshape(B, S, 2, num_heads, head_dim)
    q, k = qk[:, :, 0], qk[:, :, 1]
    v = v.reshape(B, S, num_heads, v_dim)

    scores = jnp.einsum("bthd,bshd->bhts", q, k)
    mask = jnp.tril(jnp.ones((S, S), dtype=scores.dtype))
    n_bhl = jnp.exp(jnp.transpose(n, (0, 2, 1)))                     # (B, H, S)
    attn = (scores * mask) / n_bhl[:, :, :, None]
    ctx = jnp.einsum("bhts,bshd->bthd", attn, v)
    ctx = ctx.reshape(B, S, d_model)
    return ctx @ params["out_w"] + params["out_b"]


# ------------------------------------------------------------------ #
def make_params(key, d_model, d_qk, num_heads):
    ks = jax.random.split(key, 8)
    scale = 1.0 / jnp.sqrt(d_model)
    return {
        "wqk_w": jax.random.normal(ks[0], (d_model, 2 * d_qk), jnp.float32) * scale,
        "wqk_b": jax.random.normal(ks[1], (2 * d_qk,), jnp.float32) * 0.02,
        "wv_w": jax.random.normal(ks[2], (d_model, d_model), jnp.float32) * scale,
        "wv_b": jax.random.normal(ks[3], (d_model,), jnp.float32) * 0.02,
        "wn_w": jax.random.normal(ks[4], (d_model, num_heads), jnp.float32) * scale,
        "wn_b": jax.random.normal(ks[5], (num_heads,), jnp.float32) * 0.02,
        "out_w": jax.random.normal(ks[6], (d_model, d_model), jnp.float32) * scale,
        "out_b": jax.random.normal(ks[7], (d_model,), jnp.float32) * 0.02,
    }


if __name__ == "__main__":
    B, S, d_model, num_heads = 2, 8, 32, 2
    d_qk = d_model  # default: d_qk = d_model

    key = jax.random.PRNGKey(0)
    kx, kp = jax.random.split(key)
    x = jax.random.normal(kx, (B, S, d_model), jnp.float32)
    params = make_params(kp, d_model, d_qk, num_heads)

    ref = mhna_reference(x, params, num_heads)

    # f32 path (exact check against the reference).
    fwd = jax.jit(functools.partial(mhna_forward, num_heads=num_heads))
    out = jax.block_until_ready(fwd(x, params))
    assert out.shape == (B, S, d_model)
    assert jnp.allclose(out, ref, atol=1e-4, rtol=1e-4), "f32 mismatch vs reference"

    # bf16-MXU-input path (recommended on v6e/v7x): f32 accumulation, relaxed check.
    fwd_bf16 = jax.jit(functools.partial(mhna_forward, num_heads=num_heads,
                                         compute_dtype=jnp.bfloat16))
    out_bf16 = jax.block_until_ready(fwd_bf16(x, params))
    max_err = float(jnp.max(jnp.abs(out_bf16.astype(jnp.float32) - ref)))
    max_ref = float(jnp.max(jnp.abs(ref)))
    assert max_err <= 5e-2 * max_ref, f"bf16 path error too large: {max_err} vs {max_ref}"

    print("KERNEL_OK")
</pallas_src>

<mosaic_0001>
module attributes {stable_mosaic.version = 11 : i64} {
  func.func @_linear_kernel(%arg0: i32, %arg1: i32, %arg2: i32, %arg3: memref<16x32xf32, #tpu.memory_space<vmem>>, %arg4: memref<32x98xf32, #tpu.memory_space<vmem>>, %arg5: memref<1x98xf32, #tpu.memory_space<vmem>>, %arg6: memref<16x98xf32, #tpu.memory_space<vmem>>, %arg7: memref<16x98xf32, #tpu.memory_space<vmem>>) attributes {dimension_semantics = [#tpu.dimension_semantics<parallel>, #tpu.dimension_semantics<parallel>, #tpu.dimension_semantics<arbitrary>], iteration_bounds = array<i64: 1, 1, 1>, scalar_prefetch = 0 : i64, scratch_operands = 1 : i64, tpu.core_type = #tpu.core_type<tc>, window_params = [{transform_indices = @transform_0, window_bounds = array<i64: 16, 32>}, {transform_indices = @transform_1, window_bounds = array<i64: 32, 98>}, {transform_indices = @transform_2, window_bounds = array<i64: 1, 98>}, {transform_indices = @transform_3, window_bounds = array<i64: 16, 98>}]} {
    %c0_i32 = arith.constant 0 : i32
    %0 = arith.cmpi eq, %arg2, %c0_i32 : i32
    %1 = arith.extui %0 : i1 to i32
    %c0_i32_0 = arith.constant 0 : i32
    %2 = arith.cmpi ne, %1, %c0_i32_0 : i32
    scf.if %2 {
      %cst_10 = arith.constant 0.000000e+00 : f32
      %12 = vector.broadcast %cst_10 : f32 to vector<16x98xf32>
      %c0_11 = arith.constant 0 : index
      %c0_12 = arith.constant 0 : index
      %13 = vector.load %arg7[%c0_11, %c0_12] : memref<16x98xf32, #tpu.memory_space<vmem>>, vector<16x98xf32>
      tpu.vector_store %arg7[%c0_11, %c0_12], %12 {strides = array<i32>} : memref<16x98xf32, #tpu.memory_space<vmem>>, vector<16x98xf32>,
    } else {
    }
    %c0 = arith.constant 0 : index
    %c0_1 = arith.constant 0 : index
    %3 = vector.load %arg7[%c0, %c0_1] : memref<16x98xf32, #tpu.memory_space<vmem>>, vector<16x98xf32>
    %c0_2 = arith.constant 0 : index
    %c0_3 = arith.constant 0 : index
    %4 = vector.load %arg3[%c0_2, %c0_3] : memref<16x32xf32, #tpu.memory_space<vmem>>, vector<16x32xf32>
    %c0_4 = arith.constant 0 : index
    %c0_5 = arith.constant 0 : index
    %5 = vector.load %arg4[%c0_4, %c0_5] : memref<32x98xf32, #tpu.memory_space<vmem>>, vector<32x98xf32>
    %cst = arith.constant dense<0.000000e+00> : vector<16x98xf32>
    %6 = tpu.matmul %4, %5, %cst {dimension_numbers = #tpu.dot_dimension_numbers<[1], [0], [0], [1], [0, 0, 1, 1], [], []>} : vector<16x32xf32>, vector<32x98xf32>, vector<16x98xf32> -> vector<16x98xf32>
    %7 = arith.addf %3, %6 : vector<16x98xf32>
    %c0_6 = arith.constant 0 : index
    %c0_7 = arith.constant 0 : index
    %8 = vector.load %arg7[%c0_6, %c0_7] : memref<16x98xf32, #tpu.memory_space<vmem>>, vector<16x98xf32>
    tpu.vector_store %arg7[%c0_6, %c0_7], %7 {strides = array<i32>} : memref<16x98xf32, #tpu.memory_space<vmem>>, vector<16x98xf32>,
    %c0_i32_8 = arith.constant 0 : i32
    %9 = arith.cmpi eq, %arg2, %c0_i32_8 : i32
    %10 = arith.extui %9 : i1 to i32
    %c0_i32_9 = arith.constant 0 : i32
    %11 = arith.cmpi ne, %10, %c0_i32_9 : i32
    scf.if %11 {
      %c0_10 = arith.constant 0 : index
      %c0_11 = arith.constant 0 : index
      %12 = vector.load %arg7[%c0_10, %c0_11] : memref<16x98xf32, #tpu.memory_space<vmem>>, vector<16x98xf32>
      %c0_12 = arith.constant 0 : index
      %c0_13 = arith.constant 0 : index
      %13 = vector.load %arg5[%c0_12, %c0_13] : memref<1x98xf32, #tpu.memory_space<vmem>>, vector<1x98xf32>
      %14 = vector.broadcast %13 : vector<1x98xf32> to vector<16x98xf32>
      %15 = arith.addf %12, %14 : vector<16x98xf32>
      %c0_14 = arith.constant 0 : index
      %c0_15 = arith.constant 0 : index
      %16 = vector.load %arg6[%c0_14, %c0_15] : memref<16x98xf32, #tpu.memory_space<vmem>>, vector<16x98xf32>
      tpu.vector_store %arg6[%c0_14, %c0_15], %15 {strides = array<i32>} : memref<16x98xf32, #tpu.memory_space<vmem>>, vector<16x98xf32>,
    } else {
    }
    return
  }
  func.func @transform_0(%arg0: i32, %arg1: i32, %arg2: i32) -> (i32, i32) {
    %c0_i32 = arith.constant 0 : i32
    return %arg0, %arg2 : i32, i32
  }
  func.func @transform_1(%arg0: i32, %arg1: i32, %arg2: i32) -> (i32, i32) {
    %c0_i32 = arith.constant 0 : i32
    return %arg2, %arg1 : i32, i32
  }
  func.func @transform_2(%arg0: i32, %arg1: i32, %arg2: i32) -> (i32, i32) {
    %c0_i32 = arith.constant 0 : i32
    %c0_i32_0 = arith.constant 0 : i32
    return %c0_i32, %arg1 : i32, i32
  }
  func.func @transform_3(%arg0: i32, %arg1: i32, %arg2: i32) -> (i32, i32) {
    %c0_i32 = arith.constant 0 : i32
    return %arg0, %arg1 : i32, i32
  }
}

module attributes {stable_mosaic.version = 11 : i64} {
  func.func @_norm_attn_kernel(%arg0: i32, %arg1: i32, %arg2: i32, %arg3: i32, %arg4: memref<1x1x8x16xf32, #tpu.memory_space<vmem>>, %arg5: memref<1x1x8x16xf32, #tpu.memory_space<vmem>>, %arg6: memref<1x1x8x16xf32, #tpu.memory_space<vmem>>, %arg7: memref<1x1x8x1xf32, #tpu.memory_space<vmem>>, %arg8: memref<1x1x8x16xf32, #tpu.memory_space<vmem>>, %arg9: memref<8x16xf32, #tpu.memory_space<vmem>>) attributes {dimension_semantics = [#tpu.dimension_semantics<parallel>, #tpu.dimension_semantics<parallel>, #tpu.dimension_semantics<parallel>, #tpu.dimension_semantics<arbitrary>], iteration_bounds = array<i64: 2, 2, 1, 1>, scalar_prefetch = 0 : i64, scratch_operands = 1 : i64, tpu.core_type = #tpu.core_type<tc>, window_params = [{transform_indices = @transform_0, window_bounds = array<i64: 1, 1, 8, 16>}, {transform_indices = @transform_1, window_bounds = array<i64: 1, 1, 8, 16>}, {transform_indices = @transform_2, window_bounds = array<i64: 1, 1, 8, 16>}, {transform_indices = @transform_3, window_bounds = array<i64: 1, 1, 8, 1>}, {transform_indices = @transform_4, window_bounds = array<i64: 1, 1, 8, 16>}]} {
    %c8_i32 = arith.constant 8 : i32
    %0 = arith.muli %arg2, %c8_i32 : i32
    %c8_i32_0 = arith.constant 8 : i32
    %1 = arith.muli %arg3, %c8_i32_0 : i32
    %c0_i32 = arith.constant 0 : i32
    %2 = arith.cmpi eq, %arg3, %c0_i32 : i32
    %3 = arith.extui %2 : i1 to i32
    %c0_i32_1 = arith.constant 0 : i32
    %4 = arith.cmpi ne, %3, %c0_i32_1 : i32
    scf.if %4 {
      %cst = arith.constant 0.000000e+00 : f32
      %18 = vector.broadcast %cst : f32 to vector<8x16xf32>
      %c0 = arith.constant 0 : index
      %c0_7 = arith.constant 0 : index
      %19 = vector.load %arg9[%c0, %c0_7] : memref<8x16xf32, #tpu.memory_space<vmem>>, vector<8x16xf32>
      tpu.vector_store %arg9[%c0, %c0_7], %18 {strides = array<i32>} : memref<8x16xf32, #tpu.memory_space<vmem>>, vector<8x16xf32>,
    } else {
    }
    %c7_i32 = arith.constant 7 : i32
    %5 = arith.addi %1, %c7_i32 : i32
    %6 = arith.cmpi sle, %5, %0 : i32
    %c7_i32_2 = arith.constant 7 : i32
    %7 = arith.addi %0, %c7_i32_2 : i32
    %8 = arith.cmpi sle, %1, %7 : i32
    %9 = arith.extui %6 : i1 to i32
    %c0_i32_3 = arith.constant 0 : i32
    %10 = arith.cmpi ne, %9, %c0_i32_3 : i32
    scf.if %10 {
      %c0 = arith.constant 0 : index
      %c0_7 = arith.constant 0 : index
      %c0_8 = arith.constant 0 : index
      %c0_9 = arith.constant 0 : index
      %18 = vector.load %arg4[%c0, %c0_7, %c0_8, %c0_9] : memref<1x1x8x16xf32, #tpu.memory_space<vmem>>, vector<1x1x8x16xf32>
      %19 = vector.shape_cast %18 : vector<1x1x8x16xf32> to vector<8x16xf32>
      %c0_10 = arith.constant 0 : index
      %c0_11 = arith.constant 0 : index
      %c0_12 = arith.constant 0 : index
      %c0_13 = arith.constant 0 : index
      %20 = vector.load %arg5[%c0_10, %c0_11, %c0_12, %c0_13] : memref<1x1x8x16xf32, #tpu.memory_space<vmem>>, vector<1x1x8x16xf32>
      %21 = vector.shape_cast %20 : vector<1x1x8x16xf32> to vector<8x16xf32>
      %cst = arith.constant dense<0.000000e+00> : vector<8x8xf32>
      %22 = tpu.matmul %19, %21, %cst {dimension_numbers = #tpu.dot_dimension_numbers<[1], [1], [0], [0], [0, 0, 1, 0], [], []>} : vector<8x16xf32>, vector<8x16xf32>, vector<8x8xf32> -> vector<8x8xf32>
      %c0_14 = arith.constant 0 : index
      %c0_15 = arith.constant 0 : index
      %23 = vector.load %arg9[%c0_14, %c0_15] : memref<8x16xf32, #tpu.memory_space<vmem>>, vector<8x16xf32>
      %c0_16 = arith.constant 0 : index
      %c0_17 = arith.constant 0 : index
      %c0_18 = arith.constant 0 : index
      %c0_19 = arith.constant 0 : index
      %24 = vector.load %arg6[%c0_16, %c0_17, %c0_18, %c0_19] : memref<1x1x8x16xf32, #tpu.memory_space<vmem>>, vector<1x1x8x16xf32>
      %25 = vector.shape_cast %24 : vector<1x1x8x16xf32> to vector<8x16xf32>
      %cst_20 = arith.constant dense<0.000000e+00> : vector<8x16xf32>
      %26 = tpu.matmul %22, %25, %cst_20 {dimension_numbers = #tpu.dot_dimension_numbers<[1], [0], [0], [1], [0, 0, 1, 1], [], []>} : vector<8x8xf32>, vector<8x16xf32>, vector<8x16xf32> -> vector<8x16xf32>
      %27 = arith.addf %23, %26 : vector<8x16xf32>
      %c0_21 = arith.constant 0 : index
      %c0_22 = arith.constant 0 : index
      %28 = vector.load %arg9[%c0_21, %c0_22] : memref<8x16xf32, #tpu.memory_space<vmem>>, vector<8x16xf32>
      tpu.vector_store %arg9[%c0_21, %c0_22], %27 {strides = array<i32>} : memref<8x16xf32, #tpu.memory_space<vmem>>, vector<8x16xf32>,
    } else {
    }
    %true = arith.constant true
    %11 = arith.xori %6, %true : i1
    %12 = arith.andi %8, %11 : i1
    %13 = arith.extui %12 : i1 to i32
    %c0_i32_4 = arith.constant 0 : i32
    %14 = arith.cmpi ne, %13, %c0_i32_4 : i32
    scf.if %14 {
      %c0 = arith.constant 0 : index
      %c0_7 = arith.constant 0 : index
      %c0_8 = arith.constant 0 : index
      %c0_9 = arith.constant 0 : index
      %18 = vector.load %arg4[%c0, %c0_7, %c0_8, %c0_9] : memref<1x1x8x16xf32, #tpu.memory_space<vmem>>, vector<1x1x8x16xf32>
      %19 = vector.shape_cast %18 : vector<1x1x8x16xf32> to vector<8x16xf32>
      %c0_10 = arith.constant 0 : index
      %c0_11 = arith.constant 0 : index
      %c0_12 = arith.constant 0 : index
      %c0_13 = arith.constant 0 : index
      %20 = vector.load %arg5[%c0_10, %c0_11, %c0_12, %c0_13] : memref<1x1x8x16xf32, #tpu.memory_space<vmem>>, vector<1x1x8x16xf32>
      %21 = vector.shape_cast %20 : vector<1x1x8x16xf32> to vector<8x16xf32>
      %cst = arith.constant dense<0.000000e+00> : vector<8x8xf32>
      %22 = tpu.matmul %19, %21, %cst {dimension_numbers = #tpu.dot_dimension_numbers<[1], [1], [0], [0], [0, 0, 1, 0], [], []>} : vector<8x16xf32>, vector<8x16xf32>, vector<8x8xf32> -> vector<8x8xf32>
      %23 = tpu.iota {dimensions = array<i32: 0>} : vector<8x8xi32>
      %24 = vector.broadcast %0 : i32 to vector<8x8xi32>
      %25 = arith.addi %24, %23 : vector<8x8xi32>
      %26 = tpu.iota {dimensions = array<i32: 1>} : vector<8x8xi32>
      %27 = vector.broadcast %1 : i32 to vector<8x8xi32>
      %28 = arith.addi %27, %26 : vector<8x8xi32>
      %29 = arith.cmpi sge, %25, %28 : vector<8x8xi32>
      %cst_14 = arith.constant 0.000000e+00 : f32
      %30 = vector.broadcast %cst_14 : f32 to vector<8x8xf32>
      %31 = arith.select %29, %22, %30 : vector<8x8xi1>, vector<8x8xf32>
      %c0_15 = arith.constant 0 : index
      %c0_16 = arith.constant 0 : index
      %32 = vector.load %arg9[%c0_15, %c0_16] : memref<8x16xf32, #tpu.memory_space<vmem>>, vector<8x16xf32>
      %c0_17 = arith.constant 0 : index
      %c0_18 = arith.constant 0 : index
      %c0_19 = arith.constant 0 : index
      %c0_20 = arith.constant 0 : index
      %33 = vector.load %arg6[%c0_17, %c0_18, %c0_19, %c0_20] : memref<1x1x8x16xf32, #tpu.memory_space<vmem>>, vector<1x1x8x16xf32>
      %34 = vector.shape_cast %33 : vector<1x1x8x16xf32> to vector<8x16xf32>
      %cst_21 = arith.constant dense<0.000000e+00> : vector<8x16xf32>
      %35 = tpu.matmul %31, %34, %cst_21 {dimension_numbers = #tpu.dot_dimension_numbers<[1], [0], [0], [1], [0, 0, 1, 1], [], []>} : vector<8x8xf32>, vector<8x16xf32>, vector<8x16xf32> -> vector<8x16xf32>
      %36 = arith.addf %32, %35 : vector<8x16xf32>
      %c0_22 = arith.constant 0 : index
      %c0_23 = arith.constant 0 : index
      %37 = vector.load %arg9[%c0_22, %c0_23] : memref<8x16xf32, #tpu.memory_space<vmem>>, vector<8x16xf32>
      tpu.vector_store %arg9[%c0_22, %c0_23], %36 {strides = array<i32>} : memref<8x16xf32, #tpu.memory_space<vmem>>, vector<8x16xf32>,
    } else {
    }
    %c0_i32_5 = arith.constant 0 : i32
    %15 = arith.cmpi eq, %arg3, %c0_i32_5 : i32
    %16 = arith.extui %15 : i1 to i32
    %c0_i32_6 = arith.constant 0 : i32
    %17 = arith.cmpi ne, %16, %c0_i32_6 : i32
    scf.if %17 {
      %c0 = arith.constant 0 : index
      %c0_7 = arith.constant 0 : index
      %c0_8 = arith.constant 0 : index
      %c0_9 = arith.constant 0 : index
      %18 = vector.load %arg7[%c0, %c0_7, %c0_8, %c0_9] : memref<1x1x8x1xf32, #tpu.memory_space<vmem>>, vector<1x1x8x1xf32>
      %19 = vector.shape_cast %18 : vector<1x1x8x1xf32> to vector<8x1xf32>
      %cst = arith.constant 0.000000e+00 : f32
      %20 = vector.broadcast %cst : f32 to vector<8x1xf32>
      %21 = arith.subf %20, %19 : vector<8x1xf32>
      %22 = math.exp %21 : vector<8x1xf32>
      %c0_10 = arith.constant 0 : index
      %c0_11 = arith.constant 0 : index
      %23 = vector.load %arg9[%c0_10, %c0_11] : memref<8x16xf32, #tpu.memory_space<vmem>>, vector<8x16xf32>
      %24 = vector.broadcast %22 : vector<8x1xf32> to vector<8x16xf32>
      %25 = arith.mulf %23, %24 : vector<8x16xf32>
      %c0_12 = arith.constant 0 : index
      %c0_13 = arith.constant 0 : index
      %c0_14 = arith.constant 0 : index
      %c0_15 = arith.constant 0 : index
      %26 = vector.load %arg8[%c0_12, %c0_13, %c0_14, %c0_15] : memref<1x1x8x16xf32, #tpu.memory_space<vmem>>, vector<1x1x8x16xf32>
      %27 = vector.shape_cast %26 : vector<1x1x8x16xf32> to vector<8x16xf32>
      %28 = vector.shape_cast %25 : vector<8x16xf32> to vector<1x1x8x16xf32>
      tpu.vector_store %arg8[%c0_12, %c0_13, %c0_14, %c0_15], %28 {strides = array<i32>} : memref<1x1x8x16xf32, #tpu.memory_space<vmem>>, vector<1x1x8x16xf32>,
    } else {
    }
    return
  }
  func.func @transform_0(%arg0: i32, %arg1: i32, %arg2: i32, %arg3: i32) -> (i32, i32, i32, i32) {
    %c0_i32 = arith.constant 0 : i32
    %c0_i32_0 = arith.constant 0 : i32
    return %arg0, %arg1, %arg2, %c0_i32 : i32, i32, i32, i32
  }
  func.func @transform_1(%arg0: i32, %arg1: i32, %arg2: i32, %arg3: i32) -> (i32, i32, i32, i32) {
    %c0_i32 = arith.constant 0 : i32
    %c0_i32_0 = arith.constant 0 : i32
    return %arg0, %arg1, %arg3, %c0_i32 : i32, i32, i32, i32
  }
  func.func @transform_2(%arg0: i32, %arg1: i32, %arg2: i32, %arg3: i32) -> (i32, i32, i32, i32) {
    %c0_i32 = arith.constant 0 : i32
    %c0_i32_0 = arith.constant 0 : i32
    return %arg0, %arg1, %arg3, %c0_i32 : i32, i32, i32, i32
  }
  func.func @transform_3(%arg0: i32, %arg1: i32, %arg2: i32, %arg3: i32) -> (i32, i32, i32, i32) {
    %c0_i32 = arith.constant 0 : i32
    %c0_i32_0 = arith.constant 0 : i32
    return %arg0, %arg1, %arg2, %c0_i32 : i32, i32, i32, i32
  }
  func.func @transform_4(%arg0: i32, %arg1: i32, %arg2: i32, %arg3: i32) -> (i32, i32, i32, i32) {
    %c0_i32 = arith.constant 0 : i32
    %c0_i32_0 = arith.constant 0 : i32
    return %arg0, %arg1, %arg2, %c0_i32 : i32, i32, i32, i32
  }
}

module attributes {stable_mosaic.version = 11 : i64} {
  func.func @_linear_kernel(%arg0: i32, %arg1: i32, %arg2: i32, %arg3: memref<16x32xf32, #tpu.memory_space<vmem>>, %arg4: memref<32x32xf32, #tpu.memory_space<vmem>>, %arg5: memref<1x32xf32, #tpu.memory_space<vmem>>, %arg6: memref<16x32xf32, #tpu.memory_space<vmem>>, %arg7: memref<16x32xf32, #tpu.memory_space<vmem>>) attributes {dimension_semantics = [#tpu.dimension_semantics<parallel>, #tpu.dimension_semantics<parallel>, #tpu.dimension_semantics<arbitrary>], iteration_bounds = array<i64: 1, 1, 1>, scalar_prefetch = 0 : i64, scratch_operands = 1 : i64, tpu.core_type = #tpu.core_type<tc>, window_params = [{transform_indices = @transform_0, window_bounds = array<i64: 16, 32>}, {transform_indices = @transform_1, window_bounds = array<i64: 32, 32>}, {transform_indices = @transform_2, window_bounds = array<i64: 1, 32>}, {transform_indices = @transform_3, window_bounds = array<i64: 16, 32>}]} {
    %c0_i32 = arith.constant 0 : i32
    %0 = arith.cmpi eq, %arg2, %c0_i32 : i32
    %1 = arith.extui %0 : i1 to i32
    %c0_i32_0 = arith.constant 0 : i32
    %2 = arith.cmpi ne, %1, %c0_i32_0 : i32
    scf.if %2 {
      %cst_10 = arith.constant 0.000000e+00 : f32
      %12 = vector.broadcast %cst_10 : f32 to vector<16x32xf32>
      %c0_11 = arith.constant 0 : index
      %c0_12 = arith.constant 0 : index
      %13 = vector.load %arg7[%c0_11, %c0_12] : memref<16x32xf32, #tpu.memory_space<vmem>>, vector<16x32xf32>
      tpu.vector_store %arg7[%c0_11, %c0_12], %12 {strides = array<i32>} : memref<16x32xf32, #tpu.memory_space<vmem>>, vector<16x32xf32>,
    } else {
    }
    %c0 = arith.constant 0 : index
    %c0_1 = arith.constant 0 : index
    %3 = vector.load %arg7[%c0, %c0_1] : memref<16x32xf32, #tpu.memory_space<vmem>>, vector<16x32xf32>
    %c0_2 = arith.constant 0 : index
    %c0_3 = arith.constant 0 : index
    %4 = vector.load %arg3[%c0_2, %c0_3] : memref<16x32xf32, #tpu.memory_space<vmem>>, vector<16x32xf32>
    %c0_4 = arith.constant 0 : index
    %c0_5 = arith.constant 0 : index
    %5 = vector.load %arg4[%c0_4, %c0_5] : memref<32x32xf32, #tpu.memory_space<vmem>>, vector<32x32xf32>
    %cst = arith.constant dense<0.000000e+00> : vector<16x32xf32>
    %6 = tpu.matmul %4, %5, %cst {dimension_numbers = #tpu.dot_dimension_numbers<[1], [0], [0], [1], [0, 0, 1, 1], [], []>} : vector<16x32xf32>, vector<32x32xf32>, vector<16x32xf32> -> vector<16x32xf32>
    %7 = arith.addf %3, %6 : vector<16x32xf32>
    %c0_6 = arith.constant 0 : index
    %c0_7 = arith.constant 0 : index
    %8 = vector.load %arg7[%c0_6, %c0_7] : memref<16x32xf32, #tpu.memory_space<vmem>>, vector<16x32xf32>
    tpu.vector_store %arg7[%c0_6, %c0_7], %7 {strides = array<i32>} : memref<16x32xf32, #tpu.memory_space<vmem>>, vector<16x32xf32>,
    %c0_i32_8 = arith.constant 0 : i32
    %9 = arith.cmpi eq, %arg2, %c0_i32_8 : i32
    %10 = arith.extui %9 : i1 to i32
    %c0_i32_9 = arith.constant 0 : i32
    %11 = arith.cmpi ne, %10, %c0_i32_9 : i32
    scf.if %11 {
      %c0_10 = arith.constant 0 : index
      %c0_11 = arith.constant 0 : index
      %12 = vector.load %arg7[%c0_10, %c0_11] : memref<16x32xf32, #tpu.memory_space<vmem>>, vector<16x32xf32>
      %c0_12 = arith.constant 0 : index
      %c0_13 = arith.constant 0 : index
      %13 = vector.load %arg5[%c0_12, %c0_13] : memref<1x32xf32, #tpu.memory_space<vmem>>, vector<1x32xf32>
      %14 = vector.broadcast %13 : vector<1x32xf32> to vector<16x32xf32>
      %15 = arith.addf %12, %14 : vector<16x32xf32>
      %c0_14 = arith.constant 0 : index
      %c0_15 = arith.constant 0 : index
      %16 = vector.load %arg6[%c0_14, %c0_15] : memref<16x32xf32, #tpu.memory_space<vmem>>, vector<16x32xf32>
      tpu.vector_store %arg6[%c0_14, %c0_15], %15 {strides = array<i32>} : memref<16x32xf32, #tpu.memory_space<vmem>>, vector<16x32xf32>,
    } else {
    }
    return
  }
  func.func @transform_0(%arg0: i32, %arg1: i32, %arg2: i32) -> (i32, i32) {
    %c0_i32 = arith.constant 0 : i32
    return %arg0, %arg2 : i32, i32
  }
  func.func @transform_1(%arg0: i32, %arg1: i32, %arg2: i32) -> (i32, i32) {
    %c0_i32 = arith.constant 0 : i32
    return %arg2, %arg1 : i32, i32
  }
  func.func @transform_2(%arg0: i32, %arg1: i32, %arg2: i32) -> (i32, i32) {
    %c0_i32 = arith.constant 0 : i32
    %c0_i32_0 = arith.constant 0 : i32
    return %c0_i32, %arg1 : i32, i32
  }
  func.func @transform_3(%arg0: i32, %arg1: i32, %arg2: i32) -> (i32, i32) {
    %c0_i32 = arith.constant 0 : i32
    return %arg0, %arg1 : i32, i32
  }
}

</mosaic_0001>

<llo_original>
// kernel: mhna_forward.3
$region0: #{mhna_forward.3}
  #allocation0 [shape = 'u32[]', space=smem, size = 0x4, offset = 0x4, fixed_abs, tag = 'smem constant byte address 0x4 - core index']
  #allocation1 [shape = 'u32[144,128]{1,0:T(1,128)}', space=vmem, size = 0x12000, scoped, tag = 'internal scratch']
  #allocation2 [shape = 'f32[16,98]{1,0:T(8,128)}', space=vmem, size = 0x2000, scoped, tag = 'scratch operand']
  %s0 = inlined_call_operand.vmem [shape: f32[16,32], index: 0, kind: input, shape index: {}]
  %s1 = inlined_call_operand.vmem [shape: f32[32,98], index: 1, kind: input, shape index: {}]
  %s2 = inlined_call_operand.vmem [shape: f32[1,98], index: 2, kind: input, shape index: {}]
  %s3 = inlined_call_operand.vmem [shape: f32[16,98], index: 3, kind: output, shape index: {}]
  %s4 = sld [smem:[#allocation0]]
  $region30: #{mhna_forward.3} parent=0
    _
  %s6 = ssub.s32 1, %s4
  %s7 = scalar_select 0, %s6, %s4
  // Predicated region
  $region2: #{mhna_forward.3} parent=0 // pred_check
    _
  $region3: #{mhna_forward.3} parent=0 // pred_check_branch
    %9 = sbr.rel (0) target = $region5
  $region4: #{mhna_forward.3} parent=0 // pred_region
    _
  $region5: #{mhna_forward.3} parent=0 // pred_fallthru
    _
  // Predicated region
  $region6: #{mhna_forward.3} parent=0 // pred_check
    _
  $region7: #{mhna_forward.3} parent=0 // pred_check_branch
    %11 = sbr.rel (0) target = $region9
  $region8: #{mhna_forward.3} parent=0 // pred_region
    _
  $region9: #{mhna_forward.3} parent=0 // pred_fallthru
    _
  // Predicated region
  $region10: #{mhna_forward.3} parent=0 // pred_check
    _
  $region11: #{mhna_forward.3} parent=0 // pred_check_branch
    %13 = sbr.rel (0) target = $region13
  $region12: #{mhna_forward.3} parent=0 // pred_region
    _
  $region13: #{mhna_forward.3} parent=0 // pred_fallthru
    _
  %p14 = scmp.eq.s32.totalorder 0, 0
  // Predicated region
  $region14: #{mhna_forward.3} parent=0 // pred_check
    %p15 = pneg %p14
  $region15: #{mhna_forward.3} parent=0 // pred_check_branch
    %17 = sbr.rel (%p15) target = $region17
  $region16: #{mhna_forward.3} parent=0 // pred_region
    %vm18 = vcmask 801792
    %19 = vst.msk [vmem:[#allocation2] sm:$0xff] %vm18, 0.0
    %20 = vst.msk [vmem:[#allocation2 + $0x8] sm:$0xff] %vm18, 0.0
  $region17: #{mhna_forward.3} parent=0 // pred_fallthru
    _
  %v21 = vld [vmem:[#allocation2] sm:$0xff]
  %v22 = vld [vmem:[#allocation2 + $0x8] sm:$0xff]
  %v23 = vld [vmem:[%s0] sm:$0xff]
  %v24 = vld [vmem:[%s0 + $0x8] sm:$0xff]
  %v25 = vld [vmem:[%s1] sm:$0xff]
  %v26 = vld [vmem:[%s1 + $0x8] sm:$0xff]
  %v27 = vld [vmem:[%s1 + $0x10] sm:$0xff]
  %v28 = vld [vmem:[%s1 + $0x18] sm:$0xff]
  %vm29 = vcmask 261120
  %v31 = vsel %vm29, %v23, 0
  %v34 = vsel %vm29, %v24, 0
  %36 = vmatprep.subr.mxu0 0.0
  %37 = vmatpush1.msra.mxu0 %v25
  %38 = vmatprep.subr.mxu0 0.0
  %39 = vmatpush1.msra.mxu0 %v26
  %40 = vmatprep.subr.mxu0 0.0
  %41 = vmatpush1.msra.mxu0 %v27
  %42 = vmatprep.subr.mxu0 0.0
  %43 = vmatpush1.msra.mxu0 %v28
  %44 = vmatprep.subr.mxu0 0.0
  %45 = vmatpush1.msra.mxu0 0.0
  %46 = vmatprep.subr.mxu0 0.0
  %47 = vmatpush1.msra.mxu0 0.0
  %48 = vmatprep.subr.mxu0 0.0
  %49 = vmatpush1.msra.mxu0 0.0
  %50 = vmatprep.subr.mxu0 0.0
  %51 = vmatpush1.msra.mxu0 0.0
  %52 = vmatprep.subr.mxu0 0.0
  %53 = vmatpush1.msra.mxu0 0.0
  %54 = vmatprep.subr.mxu0 0.0
  %55 = vmatpush1.msra.mxu0 0.0
  %56 = vmatprep.subr.mxu0 0.0
  %57 = vmatpush1.msra.mxu0 0.0
  %58 = vmatprep.subr.mxu0 0.0
  %59 = vmatpush1.msra.mxu0 0.0
  %60 = vmatprep.subr.mxu0 0.0
  %61 = vmatpush1.msra.mxu0 0.0
  %62 = vmatprep.subr.mxu0 0.0
  %63 = vmatpush1.msra.mxu0 0.0
  %64 = vmatprep.subr.mxu0 0.0
  %65 = vmatpush1.msra.mxu0 0.0
  %66 = vmatprep.subr.mxu0 0.0
  %67 = vmatpush1.msra.mxu0 0.0
  %68 = vmatprep.subr.mxu0 0.0
  %69 = vmatpush1.msra.mxu0 0.0
  %70 = vmatprep.subr.mxu0 0.0
  %71 = vmatpush1.msra.mxu0 0.0
  %72 = vmatprep.subr.mxu0 0.0
  %73 = vmatpush1.msra.mxu0 0.0
  %74 = vmatprep.subr.mxu0 0.0
  %75 = vmatpush1.msra.mxu0 0.0
  %76 = vmatprep.subr.mxu0 0.0
  %77 = vmatpush1.msra.mxu0 0.0
  %78 = vmatprep.subr.mxu0 0.0
  %79 = vmatpush1.msra.mxu0 0.0
  %80 = vmatprep.subr.mxu0 0.0
  %81 = vmatpush1.msra.mxu0 0.0
  %82 = vmatprep.subr.mxu0 0.0
  %83 = vmatpush1.msra.mxu0 0.0
  %84 = vmatprep.subr.mxu0 0.0
  %85 = vmatpush1.msra.mxu0 0.0
  %86 = vmatprep.subr.mxu0 0.0
  %87 = vmatpush1.msra.mxu0 0.0
  %88 = vmatprep.subr.mxu0 0.0
  %89 = vmatpush1.msra.mxu0 0.0
  %90 = vmatprep.subr.mxu0 0.0
  %91 = vmatpush1.msra.mxu0 0.0
  %92 = vmatprep.subr.mxu0 0.0
  %93 = vmatpush1.msra.mxu0 0.0
  %94 = vmatprep.subr.mxu0 0.0
  %95 = vmatpush1.msra.mxu0 0.0
  %96 = vmatprep.subr.mxu0 0.0
  %97 = vmatpush1.msra.mxu0 0.0
  %98 = vmatprep.subr.mxu0 0.0
  %99 = vmatpush1.msra.mxu0 0.0
  %100 = vmatprep.mubr.f32.mxu0 0.0
  %101 = vmatmul.mubr.f32.gmra.mrb[0].mxu0 %v31
  %v102 = vpop.f32.mrb[0].mxu0
  %v103 = vadd.f32 0.0, %v102
  %v104 = vpop.f32.mrb[0].mxu0
  %105 = vmatprep.mubr.f32.mxu0 0.0
  %106 = vmatmul.mubr.f32.gmra.mrb[0].mxu0 %v34
  %v107 = vpop.f32.mrb[0].mxu0
  %v108 = vadd.f32 0.0, %v107
  %v109 = vpop.f32.mrb[0].mxu0
  %110 = vdwg.mxu0
  %v111 = vadd.f32 %v21, %v103
  %v112 = vadd.f32 %v22, %v108
  %vm113 = vcmask 801792
  %114 = vst.msk [vmem:[#allocation2] sm:$0xff] %vm113, %v111
  %115 = vst.msk [vmem:[#allocation2 + $0x8] sm:$0xff] %vm113, %v112
  // Predicated region
  $region18: #{mhna_forward.3} parent=0 // pred_check
    %p116 = pneg %p14
  $region19: #{mhna_forward.3} parent=0 // pred_check_branch
    %118 = sbr.rel (%p116) target = $region21
  $region20: #{mhna_forward.3} parent=0 // pred_region
    %v119 = vld [vmem:[#allocation2] sm:$0xff]
    %v120 = vld [vmem:[#allocation2 + $0x8] sm:$0xff]
    %v121 = vld [vmem:[%s2] sm:$0x1]
    %v123 = vlaneseq
    %v124 = vshrl.u32 %v123, 7
    %v125 = vsub.s32 0, %v124
    %v126 = vrot.slane %v121, %v125
    %v128 = vadd.f32 %v119, %v126
    %v129 = vadd.f32 %v120, %v126
    %130 = vst.msk [vmem:[%s3] sm:$0xff] %vm113, %v128
    %131 = vst.msk [vmem:[%s3 + $0x8] sm:$0xff] %vm113, %v129
  $region21: #{mhna_forward.3} parent=0 // pred_fallthru
    _
  // Predicated region
  $region22: #{mhna_forward.3} parent=0 // pred_check
    _
  $region23: #{mhna_forward.3} parent=0 // pred_check_branch
    %133 = sbr.rel (0) target = $region25
  $region24: #{mhna_forward.3} parent=0 // pred_region
    _
  $region25: #{mhna_forward.3} parent=0 // pred_fallthru
    _
  // Predicated region
  $region26: #{mhna_forward.3} parent=0 // pred_check
    _
  $region27: #{mhna_forward.3} parent=0 // pred_check_branch
    %135 = sbr.rel (0) target = $region29
  $region28: #{mhna_forward.3} parent=0 // pred_region
    _
  $region29: #{mhna_forward.3} parent=0 // pred_fallthru
    _

// kernel: mhna_forward.4
$region0: #{mhna_forward.4}
  #allocation0 [shape = 'u32[]', space=smem, size = 0x4, offset = 0x4, fixed_abs, tag = 'smem constant byte address 0x4 - core index']
  #allocation1 [shape = 'u32[144,128]{1,0:T(1,128)}', space=vmem, size = 0x12000, scoped, tag = 'internal scratch']
  #allocation2 [shape = 'f32[8,16]{1,0:T(8,128)}', space=vmem, size = 0x1000, scoped, tag = 'scratch operand']
  %s0 = inlined_call_operand.vmem [shape: f32[2,2,8,16], index: 0, kind: input, shape index: {}]
  %s1 = inlined_call_operand.vmem [shape: f32[2,2,8,16], index: 1, kind: input, shape index: {}]
  %s2 = inlined_call_operand.vmem [shape: f32[2,2,8,16], index: 2, kind: input, shape index: {}]
  %s3 = inlined_call_operand.vmem [shape: f32[2,2,8,1], index: 3, kind: input, shape index: {}]
  %s4 = inlined_call_operand.vmem [shape: f32[2,2,8,16], index: 4, kind: output, shape index: {}]
  %s5 = sld [smem:[#allocation0]]
  $region65: #{mhna_forward.4} parent=0
    _
  %s7 = ssub.s32 1, %s5
  %s8 = scalar_select 0, %s7, %s5
  loop: start=0, step=1, limit=6
  $region2: #{mhna_forward.4} parent=0 // loop_pre_header
    _
  $region3: #{mhna_forward.4} parent=0 // loop_header
    %s10 = sphi 0, %s14
    %p11 = scmp.ge.s32.totalorder %s10, 6
    %s17 = sphi 0, %s43
    %s18 = sphi 0, %s39
    %s19 = sphi 0, %s35
    %s20 = sphi 0, %s31
    %s21 = sphi 0, %s17
    %s22 = sphi 0, %s18
    %s23 = sphi 0, %s19
    %s24 = sphi 0, %s20
    %s25 = sphi 0, %s21
    %s26 = sphi 0, %s22
    %s27 = sphi 0, %s23
    %s28 = sphi 0, %s24
    %s50 = sphi 0, %s52
    %s53 = sphi 0, %s50
    %s54 = sphi 0, %s53
    %s70 = sphi 0, %s54
    %s80 = sphi 0, %s82
    %s83 = sphi 0, %s80
    %s84 = sphi 0, %s83
    %s100 = sphi 0, %s84
    %s110 = sphi 0, %s112
    %s113 = sphi 0, %s110
    %s114 = sphi 0, %s113
    %s130 = sphi 0, %s114
    %s140 = sphi 0, %s142
    %s143 = sphi 0, %s140
    %s144 = sphi 0, %s143
    %s160 = sphi 0, %s144
    %s170 = sphi 0, %s172
    %s173 = sphi 0, %s170
    %s174 = sphi 0, %s173
    %s190 = sphi 0, %s174
  $region4: #{mhna_forward.4} parent=0 // loop_header_branch
    %13 = sbr.rel (%p11) target = $region8
  $region5: #{mhna_forward.4} parent=0 // loop_body
    %s15 = ssub.s32 %s10, 1
    %s16 = ssub.s32 %s10, 2
    %s29 = sadd.s32 1, %s20
    %p30 = scmp.ge.s32.totalorder %s29, 1
    %s31 = scalar_select %p30, 0, %s29
    %s32 = sadd.s32 1, %s19
    %s33 = scalar_select %p30, %s32, %s19
    %p34 = scmp.ge.s32.totalorder %s33, 1
    %s35 = scalar_select %p34, 0, %s33
    %s36 = sadd.s32 1, %s18
    %s37 = scalar_select %p34, %s36, %s18
    %p38 = scmp.ge.s32.totalorder %s37, 2
    %s39 = scalar_select %p38, 0, %s37
    %s40 = sadd.s32 1, %s17
    %s41 = scalar_select %p38, %s40, %s17
    %p42 = scmp.ge.s32.totalorder %s41, 2
    %s43 = scalar_select %p42, 0, %s41
    %s44 = ssub.s32 %s17, %s43
    %s45 = ssub.s32 %s18, %s39
    %s46 = sor.u32 %s44, %s45
    %s47 = ssub.s32 %s19, %s35
    %s48 = sor.u32 %s46, %s47
    %p49 = scmp.eq.s32.totalorder %s48, 0
    %s51 = sadd.s32 %s50, 1
    %s52 = scalar_select %p49, %s50, %s51
    %p55 = pneg %p49
    %p56 = scmp.eq.s32.totalorder %s10, 3
    %p57 = por %p55, %p56
    %p58 = scmp.ne.s32.totalorder %s50, %s53
    %p59 = scmp.eq.s32.totalorder %s10, 0
    %p60 = por %p58, %p59
    %p61 = scmp.ne.s32.totalorder %s50, %s53
    %p62 = scmp.eq.s32.totalorder %s15, 3
    %p63 = por %p61, %p62
    %p64 = scmp.ne.s32.totalorder %s53, %s54
    %p65 = scmp.eq.s32.totalorder %s15, 0
    %p66 = por %p64, %p65
    %p67 = scmp.ne.s32.totalorder %s53, %s54
    %p68 = scmp.eq.s32.totalorder %s16, 3
    %p69 = por %p67, %p68
    %p71 = scmp.ne.s32.totalorder %s54, %s70
    %p72 = scmp.eq.s32.totalorder %s16, 0
    %p73 = por %p71, %p72
    %s74 = ssub.s32 %s17, %s43
    %s75 = ssub.s32 %s18, %s39
    %s76 = sor.u32 %s74, %s75
    %s77 = ssub.s32 %s20, %s31
    %s78 = sor.u32 %s76, %s77
    %p79 = scmp.eq.s32.totalorder %s78, 0
    %s81 = sadd.s32 %s80, 1
    %s82 = scalar_select %p79, %s80, %s81
    %p85 = pneg %p79
    %p86 = scmp.eq.s32.totalorder %s10, 3
    %p87 = por %p85, %p86
    %p88 = scmp.ne.s32.totalorder %s80, %s83
    %p89 = scmp.eq.s32.totalorder %s10, 0
    %p90 = por %p88, %p89
    %p91 = scmp.ne.s32.totalorder %s80, %s83
    %p92 = scmp.eq.s32.totalorder %s15, 3
    %p93 = por %p91, %p92
    %p94 = scmp.ne.s32.totalorder %s83, %s84
    %p95 = scmp.eq.s32.totalorder %s15, 0
    %p96 = por %p94, %p95
    %p97 = scmp.ne.s32.totalorder %s83, %s84
    %p98 = scmp.eq.s32.totalorder %s16, 3
    %p99 = por %p97, %p98
    %p101 = scmp.ne.s32.totalorder %s84, %s100
    %p102 = scmp.eq.s32.totalorder %s16, 0
    %p103 = por %p101, %p102
    %s104 = ssub.s32 %s17, %s43
    %s105 = ssub.s32 %s18, %s39
    %s106 = sor.u32 %s104, %s105
    %s107 = ssub.s32 %s20, %s31
    %s108 = sor.u32 %s106, %s107
    %p109 = scmp.eq.s32.totalorder %s108, 0
    %s111 = sadd.s32 %s110, 1
    %s112 = scalar_select %p109, %s110, %s111
    %p115 = pneg %p109
    %p116 = scmp.eq.s32.totalorder %s10, 3
    %p117 = por %p115, %p116
    %p118 = scmp.ne.s32.totalorder %s110, %s113
    %p119 = scmp.eq.s32.totalorder %s10, 0
    %p120 = por %p118, %p119
    %p121 = scmp.ne.s32.totalorder %s110, %s113
    %p122 = scmp.eq.s32.totalorder %s15, 3
    %p123 = por %p121, %p122
    %p124 = scmp.ne.s32.totalorder %s113, %s114
    %p125 = scmp.eq.s32.totalorder %s15, 0
    %p126 = por %p124, %p125
    %p127 = scmp.ne.s32.totalorder %s113, %s114
    %p128 = scmp.eq.s32.totalorder %s16, 3
    %p129 = por %p127, %p128
    %p131 = scmp.ne.s32.totalorder %s114, %s130
    %p132 = scmp.eq.s32.totalorder %s16, 0
    %p133 = por %p131, %p132
    %s134 = ssub.s32 %s17, %s43
    %s135 = ssub.s32 %s18, %s39
    %s136 = sor.u32 %s134, %s135
    %s137 = ssub.s32 %s19, %s35
    %s138 = sor.u32 %s136, %s137
    %p139 = scmp.eq.s32.totalorder %s138, 0
    %s141 = sadd.s32 %s140, 1
    %s142 = scalar_select %p139, %s140, %s141
    %p145 = pneg %p139
    %p146 = scmp.eq.s32.totalorder %s10, 3
    %p147 = por %p145, %p146
    %p148 = scmp.ne.s32.totalorder %s140, %s143
    %p149 = scmp.eq.s32.totalorder %s10, 0
    %p150 = por %p148, %p149
    %p151 = scmp.ne.s32.totalorder %s140, %s143
    %p152 = scmp.eq.s32.totalorder %s15, 3
    %p153 = por %p151, %p152
    %p154 = scmp.ne.s32.totalorder %s143, %s144
    %p155 = scmp.eq.s32.totalorder %s15, 0
    %p156 = por %p154, %p155
    %p157 = scmp.ne.s32.totalorder %s143, %s144
    %p158 = scmp.eq.s32.totalorder %s16, 3
    %p159 = por %p157, %p158
    %p161 = scmp.ne.s32.totalorder %s144, %s160
    %p162 = scmp.eq.s32.totalorder %s16, 0
    %p163 = por %p161, %p162
    %s164 = ssub.s32 %s17, %s43
    %s165 = ssub.s32 %s18, %s39
    %s166 = sor.u32 %s164, %s165
    %s167 = ssub.s32 %s19, %s35
    %s168 = sor.u32 %s166, %s167
    %p169 = scmp.eq.s32.totalorder %s168, 0
    %s171 = sadd.s32 %s170, 1
    %s172 = scalar_select %p169, %s170, %s171
    %p175 = pneg %p169
    %p176 = scmp.eq.s32.totalorder %s10, 3
    %p177 = por %p175, %p176
    %p178 = scmp.ne.s32.totalorder %s170, %s173
    %p179 = scmp.eq.s32.totalorder %s10, 0
    %p180 = por %p178, %p179
    %p181 = scmp.ne.s32.totalorder %s170, %s173
    %p182 = scmp.eq.s32.totalorder %s15, 3
    %p183 = por %p181, %p182
    %p184 = scmp.ne.s32.totalorder %s173, %s174
    %p185 = scmp.eq.s32.totalorder %s15, 0
    %p186 = por %p184, %p185
    %p187 = scmp.ne.s32.totalorder %s173, %s174
    %p188 = scmp.eq.s32.totalorder %s16, 3
    %p189 = por %p187, %p188
    %p191 = scmp.ne.s32.totalorder %s174, %s190
    %p192 = scmp.eq.s32.totalorder %s16, 0
    %p193 = por %p191, %p192
    %p194 = scmp.le.s32.totalorder 1, %s10
    %p195 = scmp.lt.s32.totalorder %s10, 5
    %p196 = pnand %p194, %p195
    %p197 = pneg %p196
    // Predicated region
    $region9: #{mhna_forward.4} parent=5 // pred_check
      _
    $region10: #{mhna_forward.4} parent=5 // pred_check_branch
      %199 = sbr.rel (%p196) target = $region12
    $region11: #{mhna_forward.4} parent=5 // pred_region
      %s200 = ssub.s32 %s10, 1
    $region12: #{mhna_forward.4} parent=5 // pred_fallthru
      _
    %p201 = scmp.lt.s32.totalorder %s10, 4
    // Predicated region
    $region13: #{mhna_forward.4} parent=5 // pred_check
      %p202 = pneg %p201
    $region14: #{mhna_forward.4} parent=5 // pred_check_branch
      %204 = sbr.rel (%p202) target = $region16
    $region15: #{mhna_forward.4} parent=5 // pred_region
      // Predicated region
      $region17: #{mhna_forward.4} parent=15 // pred_check
        %p205 = pneg %p60
      $region18: #{mhna_forward.4} parent=15 // pred_check_branch
        %207 = sbr.rel (%p205) target = $region20
      $region19: #{mhna_forward.4} parent=15 // pred_region
        %p208 = scmp.lt.s32.totalorder %s17, 1
        %s209 = scalar_select %p208, %s17, 1
        %p210 = scmp.lt.s32.totalorder %s18, 1
        %s211 = scalar_select %p210, %s18, 1
        %p212 = scmp.lt.s32.totalorder %s19, 0
        %s213 = scalar_select %p212, %s19, 0
        %s214 = sadd.s32 %s213, %s211
        %s215 = smul.addr %s209, 2
        %s216 = sadd.s32 %s214, %s215
        %s217 = smul.addr %s216, 8
        %s218 = scalar_lea.vmem %s0, %s217
      $region20: #{mhna_forward.4} parent=15 // pred_fallthru
        _
      // Predicated region
      $region21: #{mhna_forward.4} parent=15 // pred_check
        %p219 = pneg %p90
      $region22: #{mhna_forward.4} parent=15 // pred_check_branch
        %221 = sbr.rel (%p219) target = $region24
      $region23: #{mhna_forward.4} parent=15 // pred_region
        %p222 = scmp.lt.s32.totalorder %s17, 1
        %s223 = scalar_select %p222, %s17, 1
        %p224 = scmp.lt.s32.totalorder %s18, 1
        %s225 = scalar_select %p224, %s18, 1
        %p226 = scmp.lt.s32.totalorder %s20, 0
        %s227 = scalar_select %p226, %s20, 0
        %s228 = sadd.s32 %s227, %s225
        %s229 = smul.addr %s223, 2
        %s230 = sadd.s32 %s228, %s229
        %s231 = smul.addr %s230, 8
        %s232 = scalar_lea.vmem %s1, %s231
      $region24: #{mhna_forward.4} parent=15 // pred_fallthru
        _
      // Predicated region
      $region25: #{mhna_forward.4} parent=15 // pred_check
        %p233 = pneg %p120
      $region26: #{mhna_forward.4} parent=15 // pred_check_branch
        %235 = sbr.rel (%p233) target = $region28
      $region27: #{mhna_forward.4} parent=15 // pred_region
        %p236 = scmp.lt.s32.totalorder %s17, 1
        %s237 = scalar_select %p236, %s17, 1
        %p238 = scmp.lt.s32.totalorder %s18, 1
        %s239 = scalar_select %p238, %s18, 1
        %p240 = scmp.lt.s32.totalorder %s20, 0
        %s241 = scalar_select %p240, %s20, 0
        %s242 = sadd.s32 %s241, %s239
        %s243 = smul.addr %s237, 2
        %s244 = sadd.s32 %s242, %s243
        %s245 = smul.addr %s244, 8
        %s246 = scalar_lea.vmem %s2, %s245
      $region28: #{mhna_forward.4} parent=15 // pred_fallthru
        _
      // Predicated region
      $region29: #{mhna_forward.4} parent=15 // pred_check
        %p247 = pneg %p150
      $region30: #{mhna_forward.4} parent=15 // pred_check_branch
        %249 = sbr.rel (%p247) target = $region32
      $region31: #{mhna_forward.4} parent=15 // pred_region
        %p250 = scmp.lt.s32.totalorder %s17, 1
        %s251 = scalar_select %p250, %s17, 1
        %p252 = scmp.lt.s32.totalorder %s18, 1
        %s253 = scalar_select %p252, %s18, 1
        %p254 = scmp.lt.s32.totalorder %s19, 0
        %s255 = scalar_select %p254, %s19, 0
        %s256 = sadd.s32 %s255, %s253
        %s257 = smul.addr %s251, 2
        %s258 = sadd.s32 %s256, %s257
        %s259 = smul.addr %s258, 8
        %s260 = scalar_lea.vmem %s3, %s259
      $region32: #{mhna_forward.4} parent=15 // pred_fallthru
        _
    $region16: #{mhna_forward.4} parent=5 // pred_fallthru
      _
    %p261 = scmp.le.s32.totalorder 1, %s10
    %p262 = scmp.lt.s32.totalorder %s10, 5
    %p263 = pnand %p261, %p262
    %p264 = pneg %p263
    // Predicated region
    $region33: #{mhna_forward.4} parent=5 // pred_check
      _
    $region34: #{mhna_forward.4} parent=5 // pred_check_branch
      %266 = sbr.rel (%p263) target = $region36
    $region35: #{mhna_forward.4} parent=5 // pred_region
      %s267 = ssub.s32 %s10, 1
      %p268 = scmp.lt.s32.totalorder %s21, 1
      %s269 = scalar_select %p268, %s21, 1
      %p270 = scmp.lt.s32.totalorder %s22, 1
      %s271 = scalar_select %p270, %s22, 1
      %p272 = scmp.lt.s32.totalorder %s23, 0
      %s273 = scalar_select %p272, %s23, 0
      %s274 = sadd.s32 %s273, %s271
      %s275 = smul.addr %s269, 2
      %s276 = sadd.s32 %s274, %s275
      %s277 = smul.addr %s276, 8
      %s278 = scalar_lea.vmem %s0, %s277
      %p279 = pneg %p66
      %p280 = pneg %p63
      %p281 = scmp.lt.s32.totalorder %s21, 1
      %s282 = scalar_select %p281, %s21, 1
      %p283 = scmp.lt.s32.totalorder %s22, 1
      %s284 = scalar_select %p283, %s22, 1
      %p285 = scmp.lt.s32.totalorder %s24, 0
      %s286 = scalar_select %p285, %s24, 0
      %s287 = sadd.s32 %s286, %s284
      %s288 = smul.addr %s282, 2
      %s289 = sadd.s32 %s287, %s288
      %s290 = smul.addr %s289, 8
      %s291 = scalar_lea.vmem %s1, %s290
      %p292 = pneg %p96
      %p293 = pneg %p93
      %p294 = scmp.lt.s32.totalorder %s21, 1
      %s295 = scalar_select %p294, %s21, 1
      %p296 = scmp.lt.s32.totalorder %s22, 1
      %s297 = scalar_select %p296, %s22, 1
      %p298 = scmp.lt.s32.totalorder %s24, 0
      %s299 = scalar_select %p298, %s24, 0
      %s300 = sadd.s32 %s299, %s297
      %s301 = smul.addr %s295, 2
      %s302 = sadd.s32 %s300, %s301
      %s303 = smul.addr %s302, 8
      %s304 = scalar_lea.vmem %s2, %s303
      %p305 = pneg %p126
      %p306 = pneg %p123
      %p307 = scmp.lt.s32.totalorder %s21, 1
      %s308 = scalar_select %p307, %s21, 1
      %p309 = scmp.lt.s32.totalorder %s22, 1
      %s310 = scalar_select %p309, %s22, 1
      %p311 = scmp.lt.s32.totalorder %s23, 0
      %s312 = scalar_select %p311, %s23, 0
      %s313 = sadd.s32 %s312, %s310
      %s314 = smul.addr %s308, 2
      %s315 = sadd.s32 %s313, %s314
      %s316 = smul.addr %s315, 8
      %s317 = scalar_lea.vmem %s3, %s316
      %p318 = pneg %p156
      %p319 = pneg %p153
      %p320 = pneg %p186
      %p321 = pneg %p183
      %p322 = scmp.lt.s32.totalorder %s21, 1
      %s323 = scalar_select %p322, %s21, 1
      %p324 = scmp.lt.s32.totalorder %s22, 1
      %s325 = scalar_select %p324, %s22, 1
      %p326 = scmp.lt.s32.totalorder %s23, 0
      %s327 = scalar_select %p326, %s23, 0
      %s328 = sadd.s32 %s327, %s325
      %s329 = smul.addr %s323, 2
      %s330 = sadd.s32 %s328, %s329
      %s331 = smul.addr %s330, 8
      %s332 = scalar_lea.vmem %s4, %s331
      %p333 = scmp.lt.s32.totalorder %s21, 1
      %s334 = scalar_select %p333, %s21, 1
      %p335 = scmp.lt.s32.totalorder %s22, 1
      %s336 = scalar_select %p335, %s22, 1
      %p337 = scmp.lt.s32.totalorder %s23, 0
      %s338 = scalar_select %p337, %s23, 0
      %s339 = sadd.s32 %s338, %s336
      %s340 = smul.addr %s334, 2
      %s341 = sadd.s32 %s339, %s340
      %s342 = smul.addr %s341, 8
      %s343 = scalar_lea.vmem %s0, %s342
      %p344 = scmp.lt.s32.totalorder %s21, 1
      %s345 = scalar_select %p344, %s21, 1
      %p346 = scmp.lt.s32.totalorder %s22, 1
      %s347 = scalar_select %p346, %s22, 1
      %p348 = scmp.lt.s32.totalorder %s24, 0
      %s349 = scalar_select %p348, %s24, 0
      %s350 = sadd.s32 %s349, %s347
      %s351 = smul.addr %s345, 2
      %s352 = sadd.s32 %s350, %s351
      %s353 = smul.addr %s352, 8
      %s354 = scalar_lea.vmem %s1, %s353
      %p355 = scmp.lt.s32.totalorder %s21, 1
      %s356 = scalar_select %p355, %s21, 1
      %p357 = scmp.lt.s32.totalorder %s22, 1
      %s358 = scalar_select %p357, %s22, 1
      %p359 = scmp.lt.s32.totalorder %s24, 0
      %s360 = scalar_select %p359, %s24, 0
      %s361 = sadd.s32 %s360, %s358
      %s362 = smul.addr %s356, 2
      %s363 = sadd.s32 %s361, %s362
      %s364 = smul.addr %s363, 8
      %s365 = scalar_lea.vmem %s2, %s364
      %p366 = scmp.lt.s32.totalorder %s21, 1
      %s367 = scalar_select %p366, %s21, 1
      %p368 = scmp.lt.s32.totalorder %s22, 1
      %s369 = scalar_select %p368, %s22, 1
      %p370 = scmp.lt.s32.totalorder %s23, 0
      %s371 = scalar_select %p370, %s23, 0
      %s372 = sadd.s32 %s371, %s369
      %s373 = smul.addr %s367, 2
      %s374 = sadd.s32 %s372, %s373
      %s375 = smul.addr %s374, 8
      %s376 = scalar_lea.vmem %s3, %s375
      %p377 = scmp.lt.s32.totalorder %s21, 1
      %s378 = scalar_select %p377, %s21, 1
      %p379 = scmp.lt.s32.totalorder %s22, 1
      %s380 = scalar_select %p379, %s22, 1
      %p381 = scmp.lt.s32.totalorder %s23, 0
      %s382 = scalar_select %p381, %s23, 0
      %s383 = sadd.s32 %s382, %s380
      %s384 = smul.addr %s378, 2
      %s385 = sadd.s32 %s383, %s384
      %s386 = smul.addr %s385, 8
      %s387 = scalar_lea.vmem %s4, %s386
      %s388 = smul.u32 %s23, 8
      %s389 = smul.u32 %s24, 8
      %p390 = scmp.eq.s32.totalorder %s24, 0
      // Predicated region
      $region37: #{mhna_forward.4} parent=35 // pred_check
        %p391 = pneg %p390
      $region38: #{mhna_forward.4} parent=35 // pred_check_branch
        %393 = sbr.rel (%p391) target = $region40
      $region39: #{mhna_forward.4} parent=35 // pred_region
        %vm394 = vcmask 130048
        %395 = vst.msk [vmem:[#allocation2] sm:$0xff] %vm394, 0.0
      $region40: #{mhna_forward.4} parent=35 // pred_fallthru
        _
      %s396 = sadd.s32 %s389, 7
      %p397 = scmp.le.s32.totalorder %s396, %s388
      %s398 = sadd.s32 %s388, 7
      %p399 = scmp.le.s32.totalorder %s389, %s398
      // Predicated region
      $region41: #{mhna_forward.4} parent=35 // pred_check
        %p400 = pneg %p397
      $region42: #{mhna_forward.4} parent=35 // pred_check_branch
        %402 = sbr.rel (%p400) target = $region44
      $region43: #{mhna_forward.4} parent=35 // pred_region
        %v403 = vld [vmem:[%s343] sm:$0xff]
        %v404 = vld [vmem:[%s354] sm:$0xff]
        %vm405 = vcmask 130048
        %v407 = vsel %vm405, %v403, 0
        %v410 = vsel %vm405, %v404, 0
        %412 = vmatprep.subr.mxu0 0.0
        %413 = vmatpush1.xpose.msra.mxu0 %v410
        %414 = vmatprep.subr.mxu0 0.0
        %415 = vmatpush1.xpose.msra.mxu0 0.0
        %416 = vmatprep.subr.mxu0 0.0
        %417 = vmatpush1.xpose.msra.mxu0 0.0
        %418 = vmatprep.subr.mxu0 0.0
        %419 = vmatpush1.xpose.msra.mxu0 0.0
        %420 = vmatprep.subr.mxu0 0.0
        %421 = vmatpush1.xpose.msra.mxu0 0.0
        %422 = vmatprep.subr.mxu0 0.0
        %423 = vmatpush1.xpose.msra.mxu0 0.0
        %424 = vmatprep.subr.mxu0 0.0
        %425 = vmatpush1.xpose.msra.mxu0 0.0
        %426 = vmatprep.subr.mxu0 0.0
        %427 = vmatpush1.xpose.msra.mxu0 0.0
        %428 = vmatprep.subr.mxu0 0.0
        %429 = vmatpush1.xpose.msra.mxu0 0.0
        %430 = vmatprep.subr.mxu0 0.0
        %431 = vmatpush1.xpose.msra.mxu0 0.0
        %432 = vmatprep.subr.mxu0 0.0
        %433 = vmatpush1.xpose.msra.mxu0 0.0
        %434 = vmatprep.subr.mxu0 0.0
        %435 = vmatpush1.xpose.msra.mxu0 0.0
        %436 = vmatprep.subr.mxu0 0.0
        %437 = vmatpush1.xpose.msra.mxu0 0.0
        %438 = vmatprep.subr.mxu0 0.0
        %439 = vmatpush1.xpose.msra.mxu0 0.0
        %440 = vmatprep.subr.mxu0 0.0
        %441 = vmatpush1.xpose.msra.mxu0 0.0
        %442 = vmatprep.subr.mxu0 0.0
        %443 = vmatpush1.xpose.msra.mxu0 0.0
        %444 = vmatprep.subr.mxu0 0.0
        %445 = vmatpush1.xpose.msra.mxu0 0.0
        %446 = vmatprep.subr.mxu0 0.0
        %447 = vmatpush1.xpose.msra.mxu0 0.0
        %448 = vmatprep.subr.mxu0 0.0
        %449 = vmatpush1.xpose.msra.mxu0 0.0
        %450 = vmatprep.subr.mxu0 0.0
        %451 = vmatpush1.xpose.msra.mxu0 0.0
        %452 = vmatprep.subr.mxu0 0.0
        %453 = vmatpush1.xpose.msra.mxu0 0.0
        %454 = vmatprep.subr.mxu0 0.0
        %455 = vmatpush1.xpose.msra.mxu0 0.0
        %456 = vmatprep.subr.mxu0 0.0
        %457 = vmatpush1.xpose.msra.mxu0 0.0
        %458 = vmatprep.subr.mxu0 0.0
        %459 = vmatpush1.xpose.msra.mxu0 0.0
        %460 = vmatprep.subr.mxu0 0.0
        %461 = vmatpush1.xpose.msra.mxu0 0.0
        %462 = vmatprep.subr.mxu0 0.0
        %463 = vmatpush1.xpose.msra.mxu0 0.0
        %464 = vmatprep.subr.mxu0 0.0
        %465 = vmatpush1.xpose.msra.mxu0 0.0
        %466 = vmatprep.subr.mxu0 0.0
        %467 = vmatpush1.xpose.msra.mxu0 0.0
        %468 = vmatprep.subr.mxu0 0.0
        %469 = vmatpush1.xpose.msra.mxu0 0.0
        %470 = vmatprep.subr.mxu0 0.0
        %471 = vmatpush1.xpose.msra.mxu0 0.0
        %472 = vmatprep.subr.mxu0 0.0
        %473 = vmatpush1.xpose.msra.mxu0 0.0
        %474 = vmatprep.subr.mxu0 0.0
        %475 = vmatpush1.xpose.msra.mxu0 0.0
        %476 = vmatprep.mubr.f32.mxu0 0.0
        %477 = vmatmul.mubr.f32.gmra.mrb[0].mxu0 %v407
        %v478 = vpop.f32.mrb[0].mxu0
        %v479 = vadd.f32 0.0, %v478
        %v480 = vpop.f32.mrb[0].mxu0
        %481 = vdwg.mxu0
        %v482 = vld [vmem:[#allocation2] sm:$0xff]
        %v483 = vld [vmem:[%s365] sm:$0xff]
        %vm484 = vcmask 64512
        %v486 = vsel %vm484, %v479, 0
        %488 = vmatprep.subr.mxu0 0.0
        %489 = vmatpush1.msra.mxu0 %v483
        %490 = vmatprep.subr.mxu0 0.0
        %491 = vmatpush1.msra.mxu0 0.0
        %492 = vmatprep.subr.mxu0 0.0
        %493 = vmatpush1.msra.mxu0 0.0
        %494 = vmatprep.subr.mxu0 0.0
        %495 = vmatpush1.msra.mxu0 0.0
        %496 = vmatprep.subr.mxu0 0.0
        %497 = vmatpush1.msra.mxu0 0.0
        %498 = vmatprep.subr.mxu0 0.0
        %499 = vmatpush1.msra.mxu0 0.0
        %500 = vmatprep.subr.mxu0 0.0
        %501 = vmatpush1.msra.mxu0 0.0
        %502 = vmatprep.subr.mxu0 0.0
        %503 = vmatpush1.msra.mxu0 0.0
        %504 = vmatprep.subr.mxu0 0.0
        %505 = vmatpush1.msra.mxu0 0.0
        %506 = vmatprep.subr.mxu0 0.0
        %507 = vmatpush1.msra.mxu0 0.0
        %508 = vmatprep.subr.mxu0 0.0
        %509 = vmatpush1.msra.mxu0 0.0
        %510 = vmatprep.subr.mxu0 0.0
        %511 = vmatpush1.msra.mxu0 0.0
        %512 = vmatprep.subr.mxu0 0.0
        %513 = vmatpush1.msra.mxu0 0.0
        %514 = vmatprep.subr.mxu0 0.0
        %515 = vmatpush1.msra.mxu0 0.0
        %516 = vmatprep.subr.mxu0 0.0
        %517 = vmatpush1.msra.mxu0 0.0
        %518 = vmatprep.subr.mxu0 0.0
        %519 = vmatpush1.msra.mxu0 0.0
        %520 = vmatprep.subr.mxu0 0.0
        %521 = vmatpush1.msra.mxu0 0.0
        %522 = vmatprep.subr.mxu0 0.0
        %523 = vmatpush1.msra.mxu0 0.0
        %524 = vmatprep.subr.mxu0 0.0
        %525 = vmatpush1.msra.mxu0 0.0
        %526 = vmatprep.subr.mxu0 0.0
        %527 = vmatpush1.msra.mxu0 0.0
        %528 = vmatprep.subr.mxu0 0.0
        %529 = vmatpush1.msra.mxu0 0.0
        %530 = vmatprep.subr.mxu0 0.0
        %531 = vmatpush1.msra.mxu0 0.0
        %532 = vmatprep.subr.mxu0 0.0
        %533 = vmatpush1.msra.mxu0 0.0
        %534 = vmatprep.subr.mxu0 0.0
        %535 = vmatpush1.msra.mxu0 0.0
        %536 = vmatprep.subr.mxu0 0.0
        %537 = vmatpush1.msra.mxu0 0.0
        %538 = vmatprep.subr.mxu0 0.0
        %539 = vmatpush1.msra.mxu0 0.0
        %540 = vmatprep.subr.mxu0 0.0
        %541 = vmatpush1.msra.mxu0 0.0
        %542 = vmatprep.subr.mxu0 0.0
        %543 = vmatpush1.msra.mxu0 0.0
        %544 = vmatprep.subr.mxu0 0.0
        %545 = vmatpush1.msra.mxu0 0.0
        %546 = vmatprep.subr.mxu0 0.0
        %547 = vmatpush1.msra.mxu0 0.0
        %548 = vmatprep.subr.mxu0 0.0
        %549 = vmatpush1.msra.mxu0 0.0
        %550 = vmatprep.subr.mxu0 0.0
        %551 = vmatpush1.msra.mxu0 0.0
        %552 = vmatprep.mubr.f32.mxu0 0.0
        %553 = vmatmul.mubr.f32.gmra.mrb[0].mxu0 %v486
        %v554 = vpop.f32.mrb[0].mxu0
        %v555 = vadd.f32 0.0, %v554
        %v556 = vpop.f32.mrb[0].mxu0
        %557 = vdwg.mxu0
        %v558 = vadd.f32 %v482, %v555
        %559 = vst.msk [vmem:[#allocation2] sm:$0xff] %vm405, %v558
      $region44: #{mhna_forward.4} parent=35 // pred_fallthru
        _
      %p560 = scmp.gt.s32.totalorder %s396, %s388
      %p561 = pnand %p399, %p560
      %p562 = pneg %p561
      // Predicated region
      $region45: #{mhna_forward.4} parent=35 // pred_check
        _
      $region46: #{mhna_forward.4} parent=35 // pred_check_branch
        %564 = sbr.rel (%p561) target = $region48
      $region47: #{mhna_forward.4} parent=35 // pred_region
        %v565 = vld [vmem:[%s343] sm:$0xff]
        %v566 = vld [vmem:[%s354] sm:$0xff]
        %vm567 = vcmask 130048
        %v569 = vsel %vm567, %v565, 0
        %v572 = vsel %vm567, %v566, 0
        %574 = vmatprep.subr.mxu0 0.0
        %575 = vmatpush1.xpose.msra.mxu0 %v572
        %576 = vmatprep.subr.mxu0 0.0
        %577 = vmatpush1.xpose.msra.mxu0 0.0
        %578 = vmatprep.subr.mxu0 0.0
        %579 = vmatpush1.xpose.msra.mxu0 0.0
        %580 = vmatprep.subr.mxu0 0.0
        %581 = vmatpush1.xpose.msra.mxu0 0.0
        %582 = vmatprep.subr.mxu0 0.0
        %583 = vmatpush1.xpose.msra.mxu0 0.0
        %584 = vmatprep.subr.mxu0 0.0
        %585 = vmatpush1.xpose.msra.mxu0 0.0
        %586 = vmatprep.subr.mxu0 0.0
        %587 = vmatpush1.xpose.msra.mxu0 0.0
        %588 = vmatprep.subr.mxu0 0.0
        %589 = vmatpush1.xpose.msra.mxu0 0.0
        %590 = vmatprep.subr.mxu0 0.0
        %591 = vmatpush1.xpose.msra.mxu0 0.0
        %592 = vmatprep.subr.mxu0 0.0
        %593 = vmatpush1.xpose.msra.mxu0 0.0
        %594 = vmatprep.subr.mxu0 0.0
        %595 = vmatpush1.xpose.msra.mxu0 0.0
        %596 = vmatprep.subr.mxu0 0.0
        %597 = vmatpush1.xpose.msra.mxu0 0.0
        %598 = vmatprep.subr.mxu0 0.0
        %599 = vmatpush1.xpose.msra.mxu0 0.0
        %600 = vmatprep.subr.mxu0 0.0
        %601 = vmatpush1.xpose.msra.mxu0 0.0
        %602 = vmatprep.subr.mxu0 0.0
        %603 = vmatpush1.xpose.msra.mxu0 0.0
        %604 = vmatprep.subr.mxu0 0.0
        %605 = vmatpush1.xpose.msra.mxu0 0.0
        %606 = vmatprep.subr.mxu0 0.0
        %607 = vmatpush1.xpose.msra.mxu0 0.0
        %608 = vmatprep.subr.mxu0 0.0
        %609 = vmatpush1.xpose.msra.mxu0 0.0
        %610 = vmatprep.subr.mxu0 0.0
        %611 = vmatpush1.xpose.msra.mxu0 0.0
        %612 = vmatprep.subr.mxu0 0.0
        %613 = vmatpush1.xpose.msra.mxu0 0.0
        %614 = vmatprep.subr.mxu0 0.0
        %615 = vmatpush1.xpose.msra.mxu0 0.0
        %616 = vmatprep.subr.mxu0 0.0
        %617 = vmatpush1.xpose.msra.mxu0 0.0
        %618 = vmatprep.subr.mxu0 0.0
        %619 = vmatpush1.xpose.msra.mxu0 0.0
        %620 = vmatprep.subr.mxu0 0.0
        %621 = vmatpush1.xpose.msra.mxu0 0.0
        %622 = vmatprep.subr.mxu0 0.0
        %623 = vmatpush1.xpose.msra.mxu0 0.0
        %624 = vmatprep.subr.mxu0 0.0
        %625 = vmatpush1.xpose.msra.mxu0 0.0
        %626 = vmatprep.subr.mxu0 0.0
        %627 = vmatpush1.xpose.msra.mxu0 0.0
        %628 = vmatprep.subr.mxu0 0.0
        %629 = vmatpush1.xpose.msra.mxu0 0.0
        %630 = vmatprep.subr.mxu0 0.0
        %631 = vmatpush1.xpose.msra.mxu0 0.0
        %632 = vmatprep.subr.mxu0 0.0
        %633 = vmatpush1.xpose.msra.mxu0 0.0
        %634 = vmatprep.subr.mxu0 0.0
        %635 = vmatpush1.xpose.msra.mxu0 0.0
        %636 = vmatprep.subr.mxu0 0.0
        %637 = vmatpush1.xpose.msra.mxu0 0.0
        %638 = vmatprep.mubr.f32.mxu0 0.0
        %639 = vmatmul.mubr.f32.gmra.mrb[0].mxu0 %v569
        %v640 = vpop.f32.mrb[0].mxu0
        %v641 = vadd.f32 0.0, %v640
        %v642 = vpop.f32.mrb[0].mxu0
        %643 = vdwg.mxu0
        %v644 = vlaneseq
        %v645 = vshrl.u32 %v644, 7
        %v646 = vstv %s388
        %v647 = vadd.s32 %v646, %v645
        %v648 = vlaneseq
        %v649 = vand.u32 %v648, 127
        %v650 = vstv %s389
        %v651 = vadd.s32 %v650, %v649
        %vm652 = vcmp.ge.s32.totalorder %v647, %v651
        %v653 = vsel %vm652, %v641, 0.0
        %v654 = vld [vmem:[#allocation2] sm:$0xff]
        %v655 = vld [vmem:[%s365] sm:$0xff]
        %vm656 = vcmask 64512
        %v658 = vsel %vm656, %v653, 0
        %660 = vmatprep.subr.mxu0 0.0
        %661 = vmatpush1.msra.mxu0 %v655
        %662 = vmatprep.subr.mxu0 0.0
        %663 = vmatpush1.msra.mxu0 0.0
        %664 = vmatprep.subr.mxu0 0.0
        %665 = vmatpush1.msra.mxu0 0.0
        %666 = vmatprep.subr.mxu0 0.0
        %667 = vmatpush1.msra.mxu0 0.0
        %668 = vmatprep.subr.mxu0 0.0
        %669 = vmatpush1.msra.mxu0 0.0
        %670 = vmatprep.subr.mxu0 0.0
        %671 = vmatpush1.msra.mxu0 0.0
        %672 = vmatprep.subr.mxu0 0.0
        %673 = vmatpush1.msra.mxu0 0.0
        %674 = vmatprep.subr.mxu0 0.0
        %675 = vmatpush1.msra.mxu0 0.0
        %676 = vmatprep.subr.mxu0 0.0
        %677 = vmatpush1.msra.mxu0 0.0
        %678 = vmatprep.subr.mxu0 0.0
        %679 = vmatpush1.msra.mxu0 0.0
        %680 = vmatprep.subr.mxu0 0.0
        %681 = vmatpush1.msra.mxu0 0.0
        %682 = vmatprep.subr.mxu0 0.0
        %683 = vmatpush1.msra.mxu0 0.0
        %684 = vmatprep.subr.mxu0 0.0
        %685 = vmatpush1.msra.mxu0 0.0
        %686 = vmatprep.subr.mxu0 0.0
        %687 = vmatpush1.msra.mxu0 0.0
        %688 = vmatprep.subr.mxu0 0.0
        %689 = vmatpush1.msra.mxu0 0.0
        %690 = vmatprep.subr.mxu0 0.0
        %691 = vmatpush1.msra.mxu0 0.0
        %692 = vmatprep.subr.mxu0 0.0
        %693 = vmatpush1.msra.mxu0 0.0
        %694 = vmatprep.subr.mxu0 0.0
        %695 = vmatpush1.msra.mxu0 0.0
        %696 = vmatprep.subr.mxu0 0.0
        %697 = vmatpush1.msra.mxu0 0.0
        %698 = vmatprep.subr.mxu0 0.0
        %699 = vmatpush1.msra.mxu0 0.0
        %700 = vmatprep.subr.mxu0 0.0
        %701 = vmatpush1.msra.mxu0 0.0
        %702 = vmatprep.subr.mxu0 0.0
        %703 = vmatpush1.msra.mxu0 0.0
        %704 = vmatprep.subr.mxu0 0.0
        %705 = vmatpush1.msra.mxu0 0.0
        %706 = vmatprep.subr.mxu0 0.0
        %707 = vmatpush1.msra.mxu0 0.0
        %708 = vmatprep.subr.mxu0 0.0
        %709 = vmatpush1.msra.mxu0 0.0
        %710 = vmatprep.subr.mxu0 0.0
        %711 = vmatpush1.msra.mxu0 0.0
        %712 = vmatprep.subr.mxu0 0.0
        %713 = vmatpush1.msra.mxu0 0.0
        %714 = vmatprep.subr.mxu0 0.0
        %715 = vmatpush1.msra.mxu0 0.0
        %716 = vmatprep.subr.mxu0 0.0
        %717 = vmatpush1.msra.mxu0 0.0
        %718 = vmatprep.subr.mxu0 0.0
        %719 = vmatpush1.msra.mxu0 0.0
        %720 = vmatprep.subr.mxu0 0.0
        %721 = vmatpush1.msra.mxu0 0.0
        %722 = vmatprep.subr.mxu0 0.0
        %723 = vmatpush1.msra.mxu0 0.0
        %724 = vmatprep.mubr.f32.mxu0 0.0
        %725 = vmatmul.mubr.f32.gmra.mrb[0].mxu0 %v658
        %v726 = vpop.f32.mrb[0].mxu0
        %v727 = vadd.f32 0.0, %v726
        %v728 = vpop.f32.mrb[0].mxu0
        %729 = vdwg.mxu0
        %v730 = vadd.f32 %v654, %v727
        %731 = vst.msk [vmem:[#allocation2] sm:$0xff] %vm567, %v730
      $region48: #{mhna_forward.4} parent=35 // pred_fallthru
        _
      // Predicated region
      $region49: #{mhna_forward.4} parent=35 // pred_check
        %p732 = pneg %p390
      $region50: #{mhna_forward.4} parent=35 // pred_check_branch
        %734 = sbr.rel (%p732) target = $region52
      $region51: #{mhna_forward.4} parent=35 // pred_region
        %v735 = vld [vmem:[%s376] sm:$0xff]
        %v736 = vsub.f32 0.0, %v735
        %v737 = vmul.f32 %v736, 1.442695
        %v738 = vpow.pop %v737
        %v739 = vld [vmem:[#allocation2] sm:$0xff]
        %741 = vset.pattern.permute.xlu0 0
        %742 = vperm.xlu0 %741, %v738
        %v743 = vpop.permute.xlu0 %742
        %v745 = vmul.f32 %v739, %v743
        %vm746 = vcmask 130048
        %747 = vst.msk [vmem:[%s387] sm:$0xff] %vm746, %v745
      $region52: #{mhna_forward.4} parent=35 // pred_fallthru
        _
      %p748 = scmp.lt.s32.totalorder %s21, 1
      %s749 = scalar_select %p748, %s21, 1
      %p750 = scmp.lt.s32.totalorder %s22, 1
      %s751 = scalar_select %p750, %s22, 1
      %p752 = scmp.lt.s32.totalorder %s23, 0
      %s753 = scalar_select %p752, %s23, 0
      %s754 = sadd.s32 %s753, %s751
      %s755 = smul.addr %s749, 2
      %s756 = sadd.s32 %s754, %s755
      %s757 = smul.addr %s756, 8
      %s758 = scalar_lea.vmem %s4, %s757
      // Predicated region
      $region53: #{mhna_forward.4} parent=35 // pred_check
        %p759 = pneg %p183
      $region54: #{mhna_forward.4} parent=35 // pred_check_branch
        %761 = sbr.rel (%p759) target = $region56
      $region55: #{mhna_forward.4} parent=35 // pred_region
        _
      $region56: #{mhna_forward.4} parent=35 // pred_fallthru
        _
    $region36: #{mhna_forward.4} parent=5 // pred_fallthru
      _
    %p762 = scmp.le.s32.totalorder 2, %s10
    // Predicated region
    $region57: #{mhna_forward.4} parent=5 // pred_check
      %p763 = pneg %p762
    $region58: #{mhna_forward.4} parent=5 // pred_check_branch
      %765 = sbr.rel (%p763) target = $region60
    $region59: #{mhna_forward.4} parent=5 // pred_region
      %s766 = ssub.s32 %s10, 2
      // Predicated region
      $region61: #{mhna_forward.4} parent=59 // pred_check
        %p767 = pneg %p189
      $region62: #{mhna_forward.4} parent=59 // pred_check_branch
        %769 = sbr.rel (%p767) target = $region64
      $region63: #{mhna_forward.4} parent=59 // pred_region
        %p770 = scmp.lt.s32.totalorder %s25, 1
        %s771 = scalar_select %p770, %s25, 1
        %p772 = scmp.lt.s32.totalorder %s26, 1
        %s773 = scalar_select %p772, %s26, 1
        %p774 = scmp.lt.s32.totalorder %s27, 0
        %s775 = scalar_select %p774, %s27, 0
        %s776 = sadd.s32 %s775, %s773
        %s777 = smul.addr %s771, 2
        %s778 = sadd.s32 %s776, %s777
        %s779 = smul.addr %s778, 8
        %s780 = scalar_lea.vmem %s4, %s779
      $region64: #{mhna_forward.4} parent=59 // pred_fallthru
        _
    $region60: #{mhna_forward.4} parent=5 // pred_fallthru
      _
  $region6: #{mhna_forward.4} parent=0 // loop_footer
    %s14 = sadd.s32 1, %s10
  $region7: #{mhna_forward.4} parent=0 // loop_footer_branch
    %9 = sbr.rel target = $region3
  $region8: #{mhna_forward.4} parent=0 // loop_exit
    _

// kernel: mhna_forward.5
$region0: #{mhna_forward.5}
  #allocation0 [shape = 'u32[]', space=smem, size = 0x4, offset = 0x4, fixed_abs, tag = 'smem constant byte address 0x4 - core index']
  #allocation1 [shape = 'u32[144,128]{1,0:T(1,128)}', space=vmem, size = 0x12000, scoped, tag = 'internal scratch']
  #allocation2 [shape = 'f32[16,32]{1,0:T(8,128)}', space=vmem, size = 0x2000, scoped, tag = 'scratch operand']
  %s0 = inlined_call_operand.vmem [shape: f32[16,32], index: 0, kind: input, shape index: {}]
  %s1 = inlined_call_operand.vmem [shape: f32[32,32], index: 1, kind: input, shape index: {}]
  %s2 = inlined_call_operand.vmem [shape: f32[1,32], index: 2, kind: input, shape index: {}]
  %s3 = inlined_call_operand.hbm [shape: f32[16,32], index: 3, kind: output, shape index: {}]
  %s4 = sld [smem:[#allocation0]]
  $region30: #{mhna_forward.5} parent=0
    _
  %s6 = ssub.s32 1, %s4
  %s7 = scalar_select 0, %s6, %s4
  $region1: #{mhna_forward.5} parent=0
    #allocation3 [shape = 'u8[8192]{0}', space=vmem, size = 0x2000, scoped, tag = 'output window, operand 0, single buffered']
    #allocation4 [shape = 's32[1]{0}', space=sflag, size = 0x4, scoped, tag = 'scoped memory for mhna_forward.5']
    %8 = vsyncpa [#allocation4], 0
    // Predicated region
    $region2: #{mhna_forward.5} parent=1 // pred_check
      _
    $region3: #{mhna_forward.5} parent=1 // pred_check_branch
      %10 = sbr.rel (0) target = $region5
    $region4: #{mhna_forward.5} parent=1 // pred_region
      _
    $region5: #{mhna_forward.5} parent=1 // pred_fallthru
      _
    // Predicated region
    $region6: #{mhna_forward.5} parent=1 // pred_check
      _
    $region7: #{mhna_forward.5} parent=1 // pred_check_branch
      %12 = sbr.rel (0) target = $region9
    $region8: #{mhna_forward.5} parent=1 // pred_region
      _
    $region9: #{mhna_forward.5} parent=1 // pred_fallthru
      _
    // Predicated region
    $region10: #{mhna_forward.5} parent=1 // pred_check
      _
    $region11: #{mhna_forward.5} parent=1 // pred_check_branch
      %14 = sbr.rel (0) target = $region13
    $region12: #{mhna_forward.5} parent=1 // pred_region
      _
    $region13: #{mhna_forward.5} parent=1 // pred_fallthru
      _
    %p15 = scmp.eq.s32.totalorder 0, 0
    // Predicated region
    $region14: #{mhna_forward.5} parent=1 // pred_check
      %p16 = pneg %p15
    $region15: #{mhna_forward.5} parent=1 // pred_check_branch
      %18 = sbr.rel (%p16) target = $region17
    $region16: #{mhna_forward.5} parent=1 // pred_region
      %vm19 = vcmask 261120
      %20 = vst.msk [vmem:[#allocation2] sm:$0xff] %vm19, 0.0
      %21 = vst.msk [vmem:[#allocation2 + $0x8] sm:$0xff] %vm19, 0.0
    $region17: #{mhna_forward.5} parent=1 // pred_fallthru
      _
    %v22 = vld [vmem:[#allocation2] sm:$0xff]
    %v23 = vld [vmem:[#allocation2 + $0x8] sm:$0xff]
    %v24 = vld [vmem:[%s0] sm:$0xff]
    %v25 = vld [vmem:[%s0 + $0x8] sm:$0xff]
    %v26 = vld [vmem:[%s1] sm:$0xff]
    %v27 = vld [vmem:[%s1 + $0x8] sm:$0xff]
    %v28 = vld [vmem:[%s1 + $0x10] sm:$0xff]
    %v29 = vld [vmem:[%s1 + $0x18] sm:$0xff]
    %vm30 = vcmask 261120
    %v32 = vsel %vm30, %v24, 0
    %v35 = vsel %vm30, %v25, 0
    %37 = vmatprep.subr.mxu0 0.0
    %38 = vmatpush1.msra.mxu0 %v26
    %39 = vmatprep.subr.mxu0 0.0
    %40 = vmatpush1.msra.mxu0 %v27
    %41 = vmatprep.subr.mxu0 0.0
    %42 = vmatpush1.msra.mxu0 %v28
    %43 = vmatprep.subr.mxu0 0.0
    %44 = vmatpush1.msra.mxu0 %v29
    %45 = vmatprep.subr.mxu0 0.0
    %46 = vmatpush1.msra.mxu0 0.0
    %47 = vmatprep.subr.mxu0 0.0
    %48 = vmatpush1.msra.mxu0 0.0
    %49 = vmatprep.subr.mxu0 0.0
    %50 = vmatpush1.msra.mxu0 0.0
    %51 = vmatprep.subr.mxu0 0.0
    %52 = vmatpush1.msra.mxu0 0.0
    %53 = vmatprep.subr.mxu0 0.0
    %54 = vmatpush1.msra.mxu0 0.0
    %55 = vmatprep.subr.mxu0 0.0
    %56 = vmatpush1.msra.mxu0 0.0
    %57 = vmatprep.subr.mxu0 0.0
    %58 = vmatpush1.msra.mxu0 0.0
    %59 = vmatprep.subr.mxu0 0.0
    %60 = vmatpush1.msra.mxu0 0.0
    %61 = vmatprep.subr.mxu0 0.0
    %62 = vmatpush1.msra.mxu0 0.0
    %63 = vmatprep.subr.mxu0 0.0
    %64 = vmatpush1.msra.mxu0 0.0
    %65 = vmatprep.subr.mxu0 0.0
    %66 = vmatpush1.msra.mxu0 0.0
    %67 = vmatprep.subr.mxu0 0.0
    %68 = vmatpush1.msra.mxu0 0.0
    %69 = vmatprep.subr.mxu0 0.0
    %70 = vmatpush1.msra.mxu0 0.0
    %71 = vmatprep.subr.mxu0 0.0
    %72 = vmatpush1.msra.mxu0 0.0
    %73 = vmatprep.subr.mxu0 0.0
    %74 = vmatpush1.msra.mxu0 0.0
    %75 = vmatprep.subr.mxu0 0.0
    %76 = vmatpush1.msra.mxu0 0.0
    %77 = vmatprep.subr.mxu0 0.0
    %78 = vmatpush1.msra.mxu0 0.0
    %79 = vmatprep.subr.mxu0 0.0
    %80 = vmatpush1.msra.mxu0 0.0
    %81 = vmatprep.subr.mxu0 0.0
    %82 = vmatpush1.msra.mxu0 0.0
    %83 = vmatprep.subr.mxu0 0.0
    %84 = vmatpush1.msra.mxu0 0.0
    %85 = vmatprep.subr.mxu0 0.0
    %86 = vmatpush1.msra.mxu0 0.0
    %87 = vmatprep.subr.mxu0 0.0
    %88 = vmatpush1.msra.mxu0 0.0
    %89 = vmatprep.subr.mxu0 0.0
    %90 = vmatpush1.msra.mxu0 0.0
    %91 = vmatprep.subr.mxu0 0.0
    %92 = vmatpush1.msra.mxu0 0.0
    %93 = vmatprep.subr.mxu0 0.0
    %94 = vmatpush1.msra.mxu0 0.0
    %95 = vmatprep.subr.mxu0 0.0
    %96 = vmatpush1.msra.mxu0 0.0
    %97 = vmatprep.subr.mxu0 0.0
    %98 = vmatpush1.msra.mxu0 0.0
    %99 = vmatprep.subr.mxu0 0.0
    %100 = vmatpush1.msra.mxu0 0.0
    %101 = vmatprep.mubr.f32.mxu0 0.0
    %102 = vmatmul.mubr.f32.gmra.mrb[0].mxu0 %v32
    %v103 = vpop.f32.mrb[0].mxu0
    %v104 = vadd.f32 0.0, %v103
    %v105 = vpop.f32.mrb[0].mxu0
    %106 = vmatprep.mubr.f32.mxu0 0.0
    %107 = vmatmul.mubr.f32.gmra.mrb[0].mxu0 %v35
    %v108 = vpop.f32.mrb[0].mxu0
    %v109 = vadd.f32 0.0, %v108
    %v110 = vpop.f32.mrb[0].mxu0
    %111 = vdwg.mxu0
    %v112 = vadd.f32 %v22, %v104
    %v113 = vadd.f32 %v23, %v109
    %114 = vst.msk [vmem:[#allocation2] sm:$0xff] %vm30, %v112
    %115 = vst.msk [vmem:[#allocation2 + $0x8] sm:$0xff] %vm30, %v113
    // Predicated region
    $region18: #{mhna_forward.5} parent=1 // pred_check
      %p116 = pneg %p15
    $region19: #{mhna_forward.5} parent=1 // pred_check_branch
      %118 = sbr.rel (%p116) target = $region21
    $region20: #{mhna_forward.5} parent=1 // pred_region
      %v119 = vld [vmem:[#allocation2] sm:$0xff]
      %v120 = vld [vmem:[#allocation2 + $0x8] sm:$0xff]
      %v121 = vld [vmem:[%s2] sm:$0x1]
      %v123 = vlaneseq
      %v124 = vshrl.u32 %v123, 7
      %v125 = vsub.s32 0, %v124
      %v126 = vrot.slane %v121, %v125
      %v128 = vadd.f32 %v119, %v126
      %v129 = vadd.f32 %v120, %v126
      %130 = vst.msk [vmem:[#allocation3] sm:$0xff] %vm30, %v128
      %131 = vst.msk [vmem:[#allocation3 + $0x8] sm:$0xff] %vm30, %v129
    $region21: #{mhna_forward.5} parent=1 // pred_fallthru
      _
    // Predicated region
    $region22: #{mhna_forward.5} parent=1 // pred_check
      _
    $region23: #{mhna_forward.5} parent=1 // pred_check_branch
      %133 = sbr.rel (0) target = $region25
    $region24: #{mhna_forward.5} parent=1 // pred_region
      %s135 = ssub.s32 256, 256
      %136 = vsyncadd [#allocation4], %s135
      %s137 = sshll.u32 [#allocation3], 4
      %s138 = int_to_ptr.vmem [resolvable:$true] %s137
      %143 = dma.vmem_to_hbm [thread:$0]  %s138, 256, %s3, [#allocation4], 128, 128, 8
    $region25: #{mhna_forward.5} parent=1 // pred_fallthru
      _
    // Predicated region
    $region26: #{mhna_forward.5} parent=1 // pred_check
      _
    $region27: #{mhna_forward.5} parent=1 // pred_check_branch
      %145 = sbr.rel (0) target = $region29
    $region28: #{mhna_forward.5} parent=1 // pred_region
      %146 = dma.done [#allocation4], 256
    $region29: #{mhna_forward.5} parent=1 // pred_fallthru
      _
    %147 = vsyncpa [#allocation4], 1

</llo_original>
